<compile_context>
chip_gen: v5e
topology: v5e:2x2
jax: 0.10.0
libtpu: 0.0.40
codegen_flags: <defaults>
</compile_context>

<pallas_src>
import functools

import jax
import jax.numpy as jnp
from jax.experimental import pallas as pl
from jax.experimental.pallas import tpu as pltpu


# ----------------------------- exact GELU (erf) ------------------------------
_ERF_P = 0.3275911
_ERF_A = (0.254829592, -0.284496736, 1.421413741, -1.453152027, 1.061405429)


def _erf_approx(x):
    # Abramowitz & Stegun 7.1.26, |error| < 1.5e-7 — uses only exp/mul/add/where,
    # which all lower cleanly in Mosaic (no erf primitive required in-kernel).
    a1, a2, a3, a4, a5 = _ERF_A
    ax = jnp.abs(x)
    t = 1.0 / (1.0 + _ERF_P * ax)
    poly = ((((a5 * t + a4) * t + a3) * t + a2) * t + a1) * t
    y = 1.0 - poly * jnp.exp(-ax * ax)
    return jnp.where(x < 0.0, -y, y)


def _gelu_exact(x):
    return 0.5 * x * (1.0 + _erf_approx(x * 0.7071067811865476))


# --------------------------------- kernel ------------------------------------
def _hyffn_kernel(x_ref, w1_ref, b1_ref, dwk_ref, dwb_ref, w2_ref, b2_ref,
                  out_ref, pad_ref, *, H, W):
    tb, N, C_in = x_ref.shape
    hidden = w1_ref.shape[1]
    C_out = w2_ref.shape[1]

    # ---- fc1: one (tb*N, C_in) @ (C_in, hidden) MXU dot, bf16 in / f32 acc ----
    x2d = x_ref[...].reshape(tb * N, C_in)
    h1 = jnp.dot(x2d.astype(jnp.bfloat16), w1_ref[...],
                 preferred_element_type=jnp.float32)
    h1 = h1 + b1_ref[...]                                      # (tb*N, hidden) f32

    # ---- depthwise 3x3 conv (stride 1, zero pad 1), channel-last on the VPU ---
    pad_ref[...] = jnp.zeros_like(pad_ref)                     # zero halo
    pad_ref[:, 1:H + 1, 1:W + 1, :] = h1.reshape(tb, H, W, hidden)
    taps = dwk_ref[...]                                        # (9, hidden) f32
    conv = jnp.zeros((tb, H, W, hidden), jnp.float32)
    for di in range(3):
        for dj in range(3):
            t = 3 * di + dj
            w_tap = taps[t:t + 1, :].reshape(1, 1, 1, hidden)
            conv = conv + pad_ref[:, di:di + H, dj:dj + W, :] * w_tap
    conv = conv + dwb_ref[...].reshape(1, 1, 1, hidden)

    # ---- exact GELU (fp32, VPU/EUP) ----
    g = _gelu_exact(conv).reshape(tb * N, hidden)

    # ---- fc2: one (tb*N, hidden) @ (hidden, C_out) MXU dot, bf16 in / f32 acc --
    y = jnp.dot(g.astype(jnp.bfloat16), w2_ref[...],
                preferred_element_type=jnp.float32)
    y = y + b2_ref[...]
    out_ref[...] = y.reshape(tb, N, C_out)


# --------------------------------- wrapper ------------------------------------
def hyffn_forward(x, w1, b1, dwk, dwb, w2, b2, *, H, W, batch_tile=None):
    """x: (B, N, C_in) with N == H*W.  Weights in (in, out) layout; dwk: (9, hidden)."""
    B, N, C_in = x.shape
    hidden = w1.shape[1]
    C_out = w2.shape[1]
    assert N == H * W
    assert w1.shape == (C_in, hidden) and b1.shape == (hidden,)
    assert dwk.shape == (9, hidden) and dwb.shape == (hidden,)
    assert w2.shape == (hidden, C_out) and b2.shape == (C_out,)

    tb = B if batch_tile is None else batch_tile
    assert B % tb == 0

    x = x.astype(jnp.float32)
    w1b = w1.astype(jnp.bfloat16)          # matmul operands in bf16 (f32 accumulate)
    w2b = w2.astype(jnp.bfloat16)
    b1r = b1.reshape(1, hidden).astype(jnp.float32)
    b2r = b2.reshape(1, C_out).astype(jnp.float32)
    dwkr = dwk.astype(jnp.float32)
    dwbr = dwb.reshape(1, hidden).astype(jnp.float32)

    kernel = functools.partial(_hyffn_kernel, H=H, W=W)
    return pl.pallas_call(
        kernel,
        out_shape=jax.ShapeDtypeStruct((B, N, C_out), jnp.float32),
        grid_spec=pltpu.PrefetchScalarGridSpec(
            num_scalar_prefetch=0,
            grid=(B // tb,),
            in_specs=[
                pl.BlockSpec((tb, N, C_in), lambda i: (i, 0, 0)),    # x
                pl.BlockSpec((C_in, hidden), lambda i: (0, 0)),      # W1 (bf16)
                pl.BlockSpec((1, hidden), lambda i: (0, 0)),         # b1
                pl.BlockSpec((9, hidden), lambda i: (0, 0)),         # dw taps
                pl.BlockSpec((1, hidden), lambda i: (0, 0)),         # dw bias
                pl.BlockSpec((hidden, C_out), lambda i: (0, 0)),     # W2 (bf16)
                pl.BlockSpec((1, C_out), lambda i: (0, 0)),          # b2
            ],
            out_specs=pl.BlockSpec((tb, N, C_out), lambda i: (i, 0, 0)),
            scratch_shapes=[pltpu.VMEM((tb, H + 2, W + 2, hidden), jnp.float32)],
        ),
        compiler_params=pltpu.CompilerParams(dimension_semantics=("parallel",)),
    )(x, w1b, b1r, dwkr, dwbr, w2b, b2r)


# -------------------------------- reference -----------------------------------
def _reference(x, w1, b1, dwk, dwb, w2, b2, H, W):
    """Pure-JAX fp32 mirror of HyFFN.forward (3-D input branch, drop=0.0)."""
    B, N, _ = x.shape
    hidden = w1.shape[1]
    h = x @ w1 + b1
    h = h.reshape(B, H, W, hidden)
    kern = dwk.reshape(3, 3, 1, hidden)          # HWIO, I = 1 (depthwise)
    h = jax.lax.conv_general_dilated(
        h, kern, window_strides=(1, 1), padding=((1, 1), (1, 1)),
        dimension_numbers=('NHWC', 'HWIO', 'NHWC'),
        feature_group_count=hidden) + dwb
    h = h.reshape(B, N, hidden)
    h = jax.nn.gelu(h, approximate=False)        # nn.GELU default (exact erf)
    return h @ w2 + b2


if __name__ == "__main__":
    B, H, W = 2, 8, 8
    N = H * W
    C = 128          # in_features = hidden_features = out_features (HyFFN defaults)
    hidden = 128

    key = jax.random.PRNGKey(0)
    ks = jax.random.split(key, 7)
    x = jax.random.normal(ks[0], (B, N, C), jnp.float32)
    w1 = jax.random.normal(ks[1], (C, hidden), jnp.float32) * 0.05     # fc1 weight (in,out)
    b1 = jax.random.normal(ks[2], (hidden,), jnp.float32) * 0.02       # fc1 bias
    dwk = jax.random.normal(ks[3], (9, hidden), jnp.float32) * (2.0 / 9.0) ** 0.5  # dwconv 3x3 taps
    dwb = jax.random.normal(ks[4], (hidden,), jnp.float32) * 0.02      # dwconv bias
    w2 = jax.random.normal(ks[5], (hidden, C), jnp.float32) * 0.05     # fc2 weight (in,out)
    b2 = jax.random.normal(ks[6], (C,), jnp.float32) * 0.02            # fc2 bias

    out = hyffn_forward(x, w1, b1, dwk, dwb, w2, b2, H=H, W=W)
    out = jax.block_until_ready(out)

    ref = _reference(x, w1, b1, dwk, dwb, w2, b2, H, W)
    assert out.shape == (B, N, C), out.shape
    err = float(jnp.max(jnp.abs(out - ref)))
    # bf16 matmul operands (f32 accumulation) vs. the all-fp32 reference.
    assert err < 3e-2, f"mismatch vs reference: max abs err {err}"
    print("KERNEL_OK")
</pallas_src>

<mosaic_0001>
module attributes {stable_mosaic.version = 11 : i64} {
  func.func @_hyffn_kernel(%arg0: i32, %arg1: memref<2x64x128xf32, #tpu.memory_space<vmem>>, %arg2: memref<128x128xbf16, #tpu.memory_space<vmem>>, %arg3: memref<1x128xf32, #tpu.memory_space<vmem>>, %arg4: memref<9x128xf32, #tpu.memory_space<vmem>>, %arg5: memref<1x128xf32, #tpu.memory_space<vmem>>, %arg6: memref<128x128xbf16, #tpu.memory_space<vmem>>, %arg7: memref<1x128xf32, #tpu.memory_space<vmem>>, %arg8: memref<2x64x128xf32, #tpu.memory_space<vmem>>, %arg9: memref<2x10x10x128xf32, #tpu.memory_space<vmem>>) attributes {dimension_semantics = [#tpu.dimension_semantics<parallel>], iteration_bounds = array<i64: 1>, scalar_prefetch = 0 : i64, scratch_operands = 1 : i64, tpu.core_type = #tpu.core_type<tc>, window_params = [{transform_indices = @transform_0, window_bounds = array<i64: 2, 64, 128>}, {pipeline_mode = #tpu.pipeline_mode<synchronous>, transform_indices = @transform_1, window_bounds = array<i64: 128, 128>}, {pipeline_mode = #tpu.pipeline_mode<synchronous>, transform_indices = @transform_2, window_bounds = array<i64: 1, 128>}, {pipeline_mode = #tpu.pipeline_mode<synchronous>, transform_indices = @transform_3, window_bounds = array<i64: 9, 128>}, {pipeline_mode = #tpu.pipeline_mode<synchronous>, transform_indices = @transform_4, window_bounds = array<i64: 1, 128>}, {pipeline_mode = #tpu.pipeline_mode<synchronous>, transform_indices = @transform_5, window_bounds = array<i64: 128, 128>}, {pipeline_mode = #tpu.pipeline_mode<synchronous>, transform_indices = @transform_6, window_bounds = array<i64: 1, 128>}, {transform_indices = @transform_7, window_bounds = array<i64: 2, 64, 128>}]} {
    %c0 = arith.constant 0 : index
    %c0_0 = arith.constant 0 : index
    %c0_1 = arith.constant 0 : index
    %0 = vector.load %arg1[%c0, %c0_0, %c0_1] : memref<2x64x128xf32, #tpu.memory_space<vmem>>, vector<2x64x128xf32>
    %1 = vector.shape_cast %0 : vector<2x64x128xf32> to vector<128x128xf32>
    %2 = arith.truncf %1 : vector<128x128xf32> to vector<128x128xbf16>
    %c0_2 = arith.constant 0 : index
    %c0_3 = arith.constant 0 : index
    %3 = vector.load %arg2[%c0_2, %c0_3] : memref<128x128xbf16, #tpu.memory_space<vmem>>, vector<128x128xbf16>
    %cst = arith.constant dense<0.000000e+00> : vector<128x128xf32>
    %4 = tpu.matmul %2, %3, %cst {dimension_numbers = #tpu.dot_dimension_numbers<[1], [0], [0], [1], [0, 0, 1, 1], [], []>} : vector<128x128xbf16>, vector<128x128xbf16>, vector<128x128xf32> -> vector<128x128xf32>
    %c0_4 = arith.constant 0 : index
    %c0_5 = arith.constant 0 : index
    %5 = vector.load %arg3[%c0_4, %c0_5] : memref<1x128xf32, #tpu.memory_space<vmem>>, vector<1x128xf32>
    %6 = vector.broadcast %5 : vector<1x128xf32> to vector<128x128xf32>
    %7 = arith.addf %4, %6 : vector<128x128xf32>
    %cst_6 = arith.constant 0.000000e+00 : f32
    %8 = vector.broadcast %cst_6 : f32 to vector<2x10x10x128xf32>
    %c0_7 = arith.constant 0 : index
    %c0_8 = arith.constant 0 : index
    %c0_9 = arith.constant 0 : index
    %c0_10 = arith.constant 0 : index
    %9 = vector.load %arg9[%c0_7, %c0_8, %c0_9, %c0_10] : memref<2x10x10x128xf32, #tpu.memory_space<vmem>>, vector<2x10x10x128xf32>
    tpu.vector_store %arg9[%c0_7, %c0_8, %c0_9, %c0_10], %8 {strides = array<i32>} : memref<2x10x10x128xf32, #tpu.memory_space<vmem>>, vector<2x10x10x128xf32>,
    %10 = vector.shape_cast %7 : vector<128x128xf32> to vector<2x8x8x128xf32>
    %c0_11 = arith.constant 0 : index
    %c1 = arith.constant 1 : index
    %c1_12 = arith.constant 1 : index
    %c0_13 = arith.constant 0 : index
    %11 = vector.load %arg9[%c0_11, %c1, %c1_12, %c0_13] : memref<2x10x10x128xf32, #tpu.memory_space<vmem>>, vector<2x8x8x128xf32>
    tpu.vector_store %arg9[%c0_11, %c1, %c1_12, %c0_13], %10 {strides = array<i32>} : memref<2x10x10x128xf32, #tpu.memory_space<vmem>>, vector<2x8x8x128xf32>,
    %c0_14 = arith.constant 0 : index
    %c0_15 = arith.constant 0 : index
    %12 = vector.load %arg4[%c0_14, %c0_15] : memref<9x128xf32, #tpu.memory_space<vmem>>, vector<9x128xf32>
    %cst_16 = arith.constant 0.000000e+00 : f32
    %13 = vector.broadcast %cst_16 : f32 to vector<2x8x8x128xf32>
    %14 = vector.extract_strided_slice %12 {offsets = [0, 0], sizes = [1, 128], strides = [1, 1]} : vector<9x128xf32> to vector<1x128xf32>
    %15 = vector.shape_cast %14 : vector<1x128xf32> to vector<1x1x1x128xf32>
    %c0_17 = arith.constant 0 : index
    %c0_18 = arith.constant 0 : index
    %c0_19 = arith.constant 0 : index
    %c0_20 = arith.constant 0 : index
    %16 = vector.load %arg9[%c0_17, %c0_18, %c0_19, %c0_20] : memref<2x10x10x128xf32, #tpu.memory_space<vmem>>, vector<2x8x8x128xf32>
    %17 = vector.broadcast %15 : vector<1x1x1x128xf32> to vector<2x8x8x128xf32>
    %18 = arith.mulf %16, %17 : vector<2x8x8x128xf32>
    %19 = arith.addf %13, %18 : vector<2x8x8x128xf32>
    %20 = vector.extract_strided_slice %12 {offsets = [1, 0], sizes = [1, 128], strides = [1, 1]} : vector<9x128xf32> to vector<1x128xf32>
    %21 = vector.shape_cast %20 : vector<1x128xf32> to vector<1x1x1x128xf32>
    %c0_21 = arith.constant 0 : index
    %c0_22 = arith.constant 0 : index
    %c1_23 = arith.constant 1 : index
    %c0_24 = arith.constant 0 : index
    %22 = vector.load %arg9[%c0_21, %c0_22, %c1_23, %c0_24] : memref<2x10x10x128xf32, #tpu.memory_space<vmem>>, vector<2x8x8x128xf32>
    %23 = vector.broadcast %21 : vector<1x1x1x128xf32> to vector<2x8x8x128xf32>
    %24 = arith.mulf %22, %23 : vector<2x8x8x128xf32>
    %25 = arith.addf %19, %24 : vector<2x8x8x128xf32>
    %26 = vector.extract_strided_slice %12 {offsets = [2, 0], sizes = [1, 128], strides = [1, 1]} : vector<9x128xf32> to vector<1x128xf32>
    %27 = vector.shape_cast %26 : vector<1x128xf32> to vector<1x1x1x128xf32>
    %c0_25 = arith.constant 0 : index
    %c0_26 = arith.constant 0 : index
    %c2 = arith.constant 2 : index
    %c0_27 = arith.constant 0 : index
    %28 = vector.load %arg9[%c0_25, %c0_26, %c2, %c0_27] : memref<2x10x10x128xf32, #tpu.memory_space<vmem>>, vector<2x8x8x128xf32>
    %29 = vector.broadcast %27 : vector<1x1x1x128xf32> to vector<2x8x8x128xf32>
    %30 = arith.mulf %28, %29 : vector<2x8x8x128xf32>
    %31 = arith.addf %25, %30 : vector<2x8x8x128xf32>
    %32 = vector.extract_strided_slice %12 {offsets = [3, 0], sizes = [1, 128], strides = [1, 1]} : vector<9x128xf32> to vector<1x128xf32>
    %33 = vector.shape_cast %32 : vector<1x128xf32> to vector<1x1x1x128xf32>
    %c0_28 = arith.constant 0 : index
    %c1_29 = arith.constant 1 : index
    %c0_30 = arith.constant 0 : index
    %c0_31 = arith.constant 0 : index
    %34 = vector.load %arg9[%c0_28, %c1_29, %c0_30, %c0_31] : memref<2x10x10x128xf32, #tpu.memory_space<vmem>>, vector<2x8x8x128xf32>
    %35 = vector.broadcast %33 : vector<1x1x1x128xf32> to vector<2x8x8x128xf32>
    %36 = arith.mulf %34, %35 : vector<2x8x8x128xf32>
    %37 = arith.addf %31, %36 : vector<2x8x8x128xf32>
    %38 = vector.extract_strided_slice %12 {offsets = [4, 0], sizes = [1, 128], strides = [1, 1]} : vector<9x128xf32> to vector<1x128xf32>
    %39 = vector.shape_cast %38 : vector<1x128xf32> to vector<1x1x1x128xf32>
    %c0_32 = arith.constant 0 : index
    %c1_33 = arith.constant 1 : index
    %c1_34 = arith.constant 1 : index
    %c0_35 = arith.constant 0 : index
    %40 = vector.load %arg9[%c0_32, %c1_33, %c1_34, %c0_35] : memref<2x10x10x128xf32, #tpu.memory_space<vmem>>, vector<2x8x8x128xf32>
    %41 = vector.broadcast %39 : vector<1x1x1x128xf32> to vector<2x8x8x128xf32>
    %42 = arith.mulf %40, %41 : vector<2x8x8x128xf32>
    %43 = arith.addf %37, %42 : vector<2x8x8x128xf32>
    %44 = vector.extract_strided_slice %12 {offsets = [5, 0], sizes = [1, 128], strides = [1, 1]} : vector<9x128xf32> to vector<1x128xf32>
    %45 = vector.shape_cast %44 : vector<1x128xf32> to vector<1x1x1x128xf32>
    %c0_36 = arith.constant 0 : index
    %c1_37 = arith.constant 1 : index
    %c2_38 = arith.constant 2 : index
    %c0_39 = arith.constant 0 : index
    %46 = vector.load %arg9[%c0_36, %c1_37, %c2_38, %c0_39] : memref<2x10x10x128xf32, #tpu.memory_space<vmem>>, vector<2x8x8x128xf32>
    %47 = vector.broadcast %45 : vector<1x1x1x128xf32> to vector<2x8x8x128xf32>
    %48 = arith.mulf %46, %47 : vector<2x8x8x128xf32>
    %49 = arith.addf %43, %48 : vector<2x8x8x128xf32>
    %50 = vector.extract_strided_slice %12 {offsets = [6, 0], sizes = [1, 128], strides = [1, 1]} : vector<9x128xf32> to vector<1x128xf32>
    %51 = vector.shape_cast %50 : vector<1x128xf32> to vector<1x1x1x128xf32>
    %c0_40 = arith.constant 0 : index
    %c2_41 = arith.constant 2 : index
    %c0_42 = arith.constant 0 : index
    %c0_43 = arith.constant 0 : index
    %52 = vector.load %arg9[%c0_40, %c2_41, %c0_42, %c0_43] : memref<2x10x10x128xf32, #tpu.memory_space<vmem>>, vector<2x8x8x128xf32>
    %53 = vector.broadcast %51 : vector<1x1x1x128xf32> to vector<2x8x8x128xf32>
    %54 = arith.mulf %52, %53 : vector<2x8x8x128xf32>
    %55 = arith.addf %49, %54 : vector<2x8x8x128xf32>
    %56 = vector.extract_strided_slice %12 {offsets = [7, 0], sizes = [1, 128], strides = [1, 1]} : vector<9x128xf32> to vector<1x128xf32>
    %57 = vector.shape_cast %56 : vector<1x128xf32> to vector<1x1x1x128xf32>
    %c0_44 = arith.constant 0 : index
    %c2_45 = arith.constant 2 : index
    %c1_46 = arith.constant 1 : index
    %c0_47 = arith.constant 0 : index
    %58 = vector.load %arg9[%c0_44, %c2_45, %c1_46, %c0_47] : memref<2x10x10x128xf32, #tpu.memory_space<vmem>>, vector<2x8x8x128xf32>
    %59 = vector.broadcast %57 : vector<1x1x1x128xf32> to vector<2x8x8x128xf32>
    %60 = arith.mulf %58, %59 : vector<2x8x8x128xf32>
    %61 = arith.addf %55, %60 : vector<2x8x8x128xf32>
    %62 = vector.extract_strided_slice %12 {offsets = [8, 0], sizes = [1, 128], strides = [1, 1]} : vector<9x128xf32> to vector<1x128xf32>
    %63 = vector.shape_cast %62 : vector<1x128xf32> to vector<1x1x1x128xf32>
    %c0_48 = arith.constant 0 : index
    %c2_49 = arith.constant 2 : index
    %c2_50 = arith.constant 2 : index
    %c0_51 = arith.constant 0 : index
    %64 = vector.load %arg9[%c0_48, %c2_49, %c2_50, %c0_51] : memref<2x10x10x128xf32, #tpu.memory_space<vmem>>, vector<2x8x8x128xf32>
    %65 = vector.broadcast %63 : vector<1x1x1x128xf32> to vector<2x8x8x128xf32>
    %66 = arith.mulf %64, %65 : vector<2x8x8x128xf32>
    %67 = arith.addf %61, %66 : vector<2x8x8x128xf32>
    %c0_52 = arith.constant 0 : index
    %c0_53 = arith.constant 0 : index
    %68 = vector.load %arg5[%c0_52, %c0_53] : memref<1x128xf32, #tpu.memory_space<vmem>>, vector<1x128xf32>
    %69 = vector.shape_cast %68 : vector<1x128xf32> to vector<1x1x1x128xf32>
    %70 = vector.broadcast %69 : vector<1x1x1x128xf32> to vector<2x8x8x128xf32>
    %71 = arith.addf %67, %70 : vector<2x8x8x128xf32>
    %cst_54 = arith.constant 5.000000e-01 : f32
    %72 = vector.broadcast %cst_54 : f32 to vector<2x8x8x128xf32>
    %73 = arith.mulf %72, %71 : vector<2x8x8x128xf32>
    %cst_55 = arith.constant 0.707106769 : f32
    %74 = vector.broadcast %cst_55 : f32 to vector<2x8x8x128xf32>
    %75 = arith.mulf %71, %74 : vector<2x8x8x128xf32>
    %76 = math.absf %75 : vector<2x8x8x128xf32>
    %cst_56 = arith.constant 0.327591091 : f32
    %77 = vector.broadcast %cst_56 : f32 to vector<2x8x8x128xf32>
    %78 = arith.mulf %77, %76 : vector<2x8x8x128xf32>
    %cst_57 = arith.constant 1.000000e+00 : f32
    %79 = vector.broadcast %cst_57 : f32 to vector<2x8x8x128xf32>
    %80 = arith.addf %79, %78 : vector<2x8x8x128xf32>
    %cst_58 = arith.constant 1.000000e+00 : f32
    %81 = vector.broadcast %cst_58 : f32 to vector<2x8x8x128xf32>
    %82 = arith.divf %81, %80 : vector<2x8x8x128xf32>
    %cst_59 = arith.constant 1.06140542 : f32
    %83 = vector.broadcast %cst_59 : f32 to vector<2x8x8x128xf32>
    %84 = arith.mulf %83, %82 : vector<2x8x8x128xf32>
    %cst_60 = arith.constant -1.45315206 : f32
    %85 = vector.broadcast %cst_60 : f32 to vector<2x8x8x128xf32>
    %86 = arith.addf %84, %85 : vector<2x8x8x128xf32>
    %87 = arith.mulf %86, %82 : vector<2x8x8x128xf32>
    %cst_61 = arith.constant 1.42141378 : f32
    %88 = vector.broadcast %cst_61 : f32 to vector<2x8x8x128xf32>
    %89 = arith.addf %87, %88 : vector<2x8x8x128xf32>
    %90 = arith.mulf %89, %82 : vector<2x8x8x128xf32>
    %cst_62 = arith.constant -0.284496725 : f32
    %91 = vector.broadcast %cst_62 : f32 to vector<2x8x8x128xf32>
    %92 = arith.addf %90, %91 : vector<2x8x8x128xf32>
    %93 = arith.mulf %92, %82 : vector<2x8x8x128xf32>
    %cst_63 = arith.constant 0.254829586 : f32
    %94 = vector.broadcast %cst_63 : f32 to vector<2x8x8x128xf32>
    %95 = arith.addf %93, %94 : vector<2x8x8x128xf32>
    %96 = arith.mulf %95, %82 : vector<2x8x8x128xf32>
    %cst_64 = arith.constant 0.000000e+00 : f32
    %97 = vector.broadcast %cst_64 : f32 to vector<2x8x8x128xf32>
    %98 = arith.subf %97, %76 : vector<2x8x8x128xf32>
    %99 = arith.mulf %98, %76 : vector<2x8x8x128xf32>
    %100 = math.exp %99 : vector<2x8x8x128xf32>
    %101 = arith.mulf %96, %100 : vector<2x8x8x128xf32>
    %cst_65 = arith.constant 1.000000e+00 : f32
    %102 = vector.broadcast %cst_65 : f32 to vector<2x8x8x128xf32>
    %103 = arith.subf %102, %101 : vector<2x8x8x128xf32>
    %cst_66 = arith.constant 0.000000e+00 : f32
    %104 = vector.broadcast %cst_66 : f32 to vector<2x8x8x128xf32>
    %105 = arith.cmpf olt, %75, %104 : vector<2x8x8x128xf32>
    %cst_67 = arith.constant 0.000000e+00 : f32
    %106 = vector.broadcast %cst_67 : f32 to vector<2x8x8x128xf32>
    %107 = arith.subf %106, %103 : vector<2x8x8x128xf32>
    %108 = arith.select %105, %107, %103 : vector<2x8x8x128xi1>, vector<2x8x8x128xf32>
    %cst_68 = arith.constant 1.000000e+00 : f32
    %109 = vector.broadcast %cst_68 : f32 to vector<2x8x8x128xf32>
    %110 = arith.addf %109, %108 : vector<2x8x8x128xf32>
    %111 = arith.mulf %73, %110 : vector<2x8x8x128xf32>
    %112 = vector.shape_cast %111 : vector<2x8x8x128xf32> to vector<128x128xf32>
    %113 = arith.truncf %112 : vector<128x128xf32> to vector<128x128xbf16>
    %c0_69 = arith.constant 0 : index
    %c0_70 = arith.constant 0 : index
    %114 = vector.load %arg6[%c0_69, %c0_70] : memref<128x128xbf16, #tpu.memory_space<vmem>>, vector<128x128xbf16>
    %cst_71 = arith.constant dense<0.000000e+00> : vector<128x128xf32>
    %115 = tpu.matmul %113, %114, %cst_71 {dimension_numbers = #tpu.dot_dimension_numbers<[1], [0], [0], [1], [0, 0, 1, 1], [], []>} : vector<128x128xbf16>, vector<128x128xbf16>, vector<128x128xf32> -> vector<128x128xf32>
    %c0_72 = arith.constant 0 : index
    %c0_73 = arith.constant 0 : index
    %116 = vector.load %arg7[%c0_72, %c0_73] : memref<1x128xf32, #tpu.memory_space<vmem>>, vector<1x128xf32>
    %117 = vector.broadcast %116 : vector<1x128xf32> to vector<128x128xf32>
    %118 = arith.addf %115, %117 : vector<128x128xf32>
    %119 = vector.shape_cast %118 : vector<128x128xf32> to vector<2x64x128xf32>
    %c0_74 = arith.constant 0 : index
    %c0_75 = arith.constant 0 : index
    %c0_76 = arith.constant 0 : index
    %120 = vector.load %arg8[%c0_74, %c0_75, %c0_76] : memref<2x64x128xf32, #tpu.memory_space<vmem>>, vector<2x64x128xf32>
    tpu.vector_store %arg8[%c0_74, %c0_75, %c0_76], %119 {strides = array<i32>} : memref<2x64x128xf32, #tpu.memory_space<vmem>>, vector<2x64x128xf32>,
    return
  }
  func.func @transform_0(%arg0: i32) -> (i32, i32, i32) {
    %c0_i32 = arith.constant 0 : i32
    %c0_i32_0 = arith.constant 0 : i32
    %c0_i32_1 = arith.constant 0 : i32
    return %arg0, %c0_i32, %c0_i32_0 : i32, i32, i32
  }
  func.func @transform_1(%arg0: i32) -> (i32, i32) {
    %c0_i32 = arith.constant 0 : i32
    %c0_i32_0 = arith.constant 0 : i32
    %c0_i32_1 = arith.constant 0 : i32
    return %c0_i32, %c0_i32_0 : i32, i32
  }
  func.func @transform_2(%arg0: i32) -> (i32, i32) {
    %c0_i32 = arith.constant 0 : i32
    %c0_i32_0 = arith.constant 0 : i32
    %c0_i32_1 = arith.constant 0 : i32
    return %c0_i32, %c0_i32_0 : i32, i32
  }
  func.func @transform_3(%arg0: i32) -> (i32, i32) {
    %c0_i32 = arith.constant 0 : i32
    %c0_i32_0 = arith.constant 0 : i32
    %c0_i32_1 = arith.constant 0 : i32
    return %c0_i32, %c0_i32_0 : i32, i32
  }
  func.func @transform_4(%arg0: i32) -> (i32, i32) {
    %c0_i32 = arith.constant 0 : i32
    %c0_i32_0 = arith.constant 0 : i32
    %c0_i32_1 = arith.constant 0 : i32
    return %c0_i32, %c0_i32_0 : i32, i32
  }
  func.func @transform_5(%arg0: i32) -> (i32, i32) {
    %c0_i32 = arith.constant 0 : i32
    %c0_i32_0 = arith.constant 0 : i32
    %c0_i32_1 = arith.constant 0 : i32
    return %c0_i32, %c0_i32_0 : i32, i32
  }
  func.func @transform_6(%arg0: i32) -> (i32, i32) {
    %c0_i32 = arith.constant 0 : i32
    %c0_i32_0 = arith.constant 0 : i32
    %c0_i32_1 = arith.constant 0 : i32
    return %c0_i32, %c0_i32_0 : i32, i32
  }
  func.func @transform_7(%arg0: i32) -> (i32, i32, i32) {
    %c0_i32 = arith.constant 0 : i32
    %c0_i32_0 = arith.constant 0 : i32
    %c0_i32_1 = arith.constant 0 : i32
    return %arg0, %c0_i32, %c0_i32_0 : i32, i32, i32
  }
}

</mosaic_0001>

<llo_original>
// kernel: tpu_custom_call.1
$region0: #{tpu_custom_call.1}
  #allocation0 [shape = 'u32[]', space=smem, size = 0x4, offset = 0x4, fixed_abs, tag = 'smem constant byte address 0x4 - core index']
  #allocation1 [shape = 'u32[72,128]{1,0:T(1,128)}', space=vmem, size = 0x9000, scoped, tag = 'internal scratch']
  #allocation2 [shape = 'f32[2,10,10,128]{3,2,1,0:T(8,128)}', space=vmem, size = 0x28000, scoped, tag = 'scratch operand']
  %s0 = inlined_call_operand.hbm [shape: f32[2,64,128], index: 0, kind: input, shape index: {}]
  %s1 = inlined_call_operand.hbm [shape: bf16[128,128], index: 1, kind: input, shape index: {}]
  %s2 = inlined_call_operand.vmem [shape: f32[1,128], index: 2, kind: input, shape index: {}]
  %s3 = inlined_call_operand.hbm [shape: f32[9,128], index: 3, kind: input, shape index: {}]
  %s4 = inlined_call_operand.vmem [shape: f32[1,128], index: 4, kind: input, shape index: {}]
  %s5 = inlined_call_operand.hbm [shape: bf16[128,128], index: 5, kind: input, shape index: {}]
  %s6 = inlined_call_operand.vmem [shape: f32[1,128], index: 6, kind: input, shape index: {}]
  %s7 = inlined_call_operand.hbm [shape: f32[2,64,128], index: 7, kind: output, shape index: {}]
  %s8 = sld [smem:[#allocation0]]
  $region54: #{tpu_custom_call.1} parent=0
    _
  %s10 = ssub.s32 1, %s8
  %s11 = scalar_select 0, %s10, %s8
  $region1: #{tpu_custom_call.1} parent=0
    #allocation3 [shape = 'u8[65536]{0}', space=vmem, size = 0x10000, scoped, tag = 'input window, operand 0, single buffered']
    #allocation4 [shape = 's32[1]{0}', space=sflag, size = 0x4, scoped, tag = 'scoped memory for tpu_custom_call.1']
    #allocation5 [shape = 's32[1]{0}', space=sflag, size = 0x4, scoped, tag = 'scoped memory for tpu_custom_call.1']
    #allocation6 [shape = 'u8[32768]{0}', space=vmem, size = 0x8000, scoped, tag = 'input window, operand 1, single buffered']
    #allocation7 [shape = 's32[1]{0}', space=sflag, size = 0x4, scoped, tag = 'scoped memory for tpu_custom_call.1']
    #allocation8 [shape = 'u8[8192]{0}', space=vmem, size = 0x2000, scoped, tag = 'input window, operand 3, single buffered']
    #allocation9 [shape = 'u8[32768]{0}', space=vmem, size = 0x8000, scoped, tag = 'input window, operand 5, single buffered']
    #allocation10 [shape = 's32[1]{0}', space=sflag, size = 0x4, scoped, tag = 'scoped memory for tpu_custom_call.1']
    #allocation11 [shape = 'u8[65536]{0}', space=vmem, size = 0x10000, scoped, tag = 'output window, operand 0, single buffered']
    %12 = vsyncpa [#allocation4], 0
    %13 = vsyncpa [#allocation7], 0
    %14 = vsyncpa [#allocation10], 0
    %15 = vsyncpa [#allocation5], 0
    // Predicated region
    $region2: #{tpu_custom_call.1} parent=1 // pred_check
      _
    $region3: #{tpu_custom_call.1} parent=1 // pred_check_branch
      %17 = sbr.rel (0) target = $region5
    $region4: #{tpu_custom_call.1} parent=1 // pred_region
      %19 = vsyncadd [#allocation4], 0
      %s20 = sshll.u32 %s0, 4
      %s21 = int_to_ptr.hbm [resolvable:$true] %s20
      %s22 = sshll.u32 [#allocation3], 4
      %s23 = int_to_ptr.vmem [resolvable:$true] %s22
      %28 = dma.hbm_to_vmem [thread:$0]  %s21, 2048, %s23, [#allocation4], 128, 128, 8
    $region5: #{tpu_custom_call.1} parent=1 // pred_fallthru
      _
    // Predicated region
    $region6: #{tpu_custom_call.1} parent=1 // pred_check
      _
    $region7: #{tpu_custom_call.1} parent=1 // pred_check_branch
      %30 = sbr.rel (0) target = $region9
    $region8: #{tpu_custom_call.1} parent=1 // pred_region
      %32 = vsyncadd [#allocation7], 0
      %s33 = sshll.u32 %s1, 4
      %s34 = int_to_ptr.hbm [resolvable:$true] %s33
      %s35 = sshll.u32 [#allocation6], 4
      %s36 = int_to_ptr.vmem [resolvable:$true] %s35
      %41 = dma.hbm_to_vmem [thread:$0]  %s34, 1024, %s36, [#allocation7], 64, 64, 4
    $region9: #{tpu_custom_call.1} parent=1 // pred_fallthru
      _
    // Predicated region
    $region10: #{tpu_custom_call.1} parent=1 // pred_check
      _
    $region11: #{tpu_custom_call.1} parent=1 // pred_check_branch
      %43 = sbr.rel (0) target = $region13
    $region12: #{tpu_custom_call.1} parent=1 // pred_region
      _
    $region13: #{tpu_custom_call.1} parent=1 // pred_fallthru
      _
    // Predicated region
    $region14: #{tpu_custom_call.1} parent=1 // pred_check
      _
    $region15: #{tpu_custom_call.1} parent=1 // pred_check_branch
      %45 = sbr.rel (0) target = $region17
    $region16: #{tpu_custom_call.1} parent=1 // pred_region
      %47 = vsyncadd [#allocation7], 0
      %s48 = sshll.u32 %s3, 4
      %s49 = int_to_ptr.hbm [resolvable:$true] %s48
      %s50 = sshll.u32 [#allocation8], 4
      %s51 = int_to_ptr.vmem [resolvable:$true] %s50
      %56 = dma.hbm_to_vmem [thread:$0]  %s49, 256, %s51, [#allocation7], 128, 128, 8
    $region17: #{tpu_custom_call.1} parent=1 // pred_fallthru
      _
    // Predicated region
    $region18: #{tpu_custom_call.1} parent=1 // pred_check
      _
    $region19: #{tpu_custom_call.1} parent=1 // pred_check_branch
      %58 = sbr.rel (0) target = $region21
    $region20: #{tpu_custom_call.1} parent=1 // pred_region
      _
    $region21: #{tpu_custom_call.1} parent=1 // pred_fallthru
      _
    // Predicated region
    $region22: #{tpu_custom_call.1} parent=1 // pred_check
      _
    $region23: #{tpu_custom_call.1} parent=1 // pred_check_branch
      %60 = sbr.rel (0) target = $region25
    $region24: #{tpu_custom_call.1} parent=1 // pred_region
      %62 = vsyncadd [#allocation10], 0
      %s63 = sshll.u32 %s5, 4
      %s64 = int_to_ptr.hbm [resolvable:$true] %s63
      %s65 = sshll.u32 [#allocation9], 4
      %s66 = int_to_ptr.vmem [resolvable:$true] %s65
      %71 = dma.hbm_to_vmem [thread:$0]  %s64, 1024, %s66, [#allocation10], 64, 64, 4
    $region25: #{tpu_custom_call.1} parent=1 // pred_fallthru
      _
    // Predicated region
    $region26: #{tpu_custom_call.1} parent=1 // pred_check
      _
    $region27: #{tpu_custom_call.1} parent=1 // pred_check_branch
      %73 = sbr.rel (0) target = $region29
    $region28: #{tpu_custom_call.1} parent=1 // pred_region
      _
    $region29: #{tpu_custom_call.1} parent=1 // pred_fallthru
      _
    // Predicated region
    $region30: #{tpu_custom_call.1} parent=1 // pred_check
      _
    $region31: #{tpu_custom_call.1} parent=1 // pred_check_branch
      %75 = sbr.rel (0) target = $region33
    $region32: #{tpu_custom_call.1} parent=1 // pred_region
      %77 = dma.done [#allocation4], 2048
    $region33: #{tpu_custom_call.1} parent=1 // pred_fallthru
      _
    // Predicated region
    $region34: #{tpu_custom_call.1} parent=1 // pred_check
      _
    $region35: #{tpu_custom_call.1} parent=1 // pred_check_branch
      %79 = sbr.rel (0) target = $region37
    $region36: #{tpu_custom_call.1} parent=1 // pred_region
      %81 = dma.done [#allocation7], 1024
    $region37: #{tpu_custom_call.1} parent=1 // pred_fallthru
      _
    // Predicated region
    $region38: #{tpu_custom_call.1} parent=1 // pred_check
      _
    $region39: #{tpu_custom_call.1} parent=1 // pred_check_branch
      %83 = sbr.rel (0) target = $region41
    $region40: #{tpu_custom_call.1} parent=1 // pred_region
      %85 = dma.done [#allocation7], 256
    $region41: #{tpu_custom_call.1} parent=1 // pred_fallthru
      _
    // Predicated region
    $region42: #{tpu_custom_call.1} parent=1 // pred_check
      _
    $region43: #{tpu_custom_call.1} parent=1 // pred_check_branch
      %87 = sbr.rel (0) target = $region45
    $region44: #{tpu_custom_call.1} parent=1 // pred_region
      %89 = dma.done [#allocation10], 1024
    $region45: #{tpu_custom_call.1} parent=1 // pred_fallthru
      _
    %v90 = vld [vmem:[#allocation3] sm:$0xff]
    %v91 = vld [vmem:[#allocation3 + $0x8] sm:$0xff]
    %v92 = vld [vmem:[#allocation3 + $0x10] sm:$0xff]
    %v93 = vld [vmem:[#allocation3 + $0x18] sm:$0xff]
    %v94 = vld [vmem:[#allocation3 + $0x20] sm:$0xff]
    %v95 = vld [vmem:[#allocation3 + $0x28] sm:$0xff]
    %v96 = vld [vmem:[#allocation3 + $0x30] sm:$0xff]
    %v97 = vld [vmem:[#allocation3 + $0x38] sm:$0xff]
    %v98 = vld [vmem:[#allocation3 + $0x40] sm:$0xff]
    %v99 = vld [vmem:[#allocation3 + $0x48] sm:$0xff]
    %v100 = vld [vmem:[#allocation3 + $0x50] sm:$0xff]
    %v101 = vld [vmem:[#allocation3 + $0x58] sm:$0xff]
    %v102 = vld [vmem:[#allocation3 + $0x60] sm:$0xff]
    %v103 = vld [vmem:[#allocation3 + $0x68] sm:$0xff]
    %v104 = vld [vmem:[#allocation3 + $0x70] sm:$0xff]
    %v105 = vld [vmem:[#allocation3 + $0x78] sm:$0xff]
    %v106 = vpack.c.bf16 %v91, %v90
    %v107 = vpack.c.bf16 %v93, %v92
    %v108 = vpack.c.bf16 %v95, %v94
    %v109 = vpack.c.bf16 %v97, %v96
    %v110 = vpack.c.bf16 %v99, %v98
    %v111 = vpack.c.bf16 %v101, %v100
    %v112 = vpack.c.bf16 %v103, %v102
    %v113 = vpack.c.bf16 %v105, %v104
    %v114 = vld [vmem:[#allocation6] sm:$0xf]
    %v115 = vld [vmem:[#allocation6 + $0x4] sm:$0xf]
    %v116 = vld [vmem:[#allocation6 + $0x8] sm:$0xf]
    %v117 = vld [vmem:[#allocation6 + $0xc] sm:$0xf]
    %v118 = vld [vmem:[#allocation6 + $0x10] sm:$0xf]
    %v119 = vld [vmem:[#allocation6 + $0x14] sm:$0xf]
    %v120 = vld [vmem:[#allocation6 + $0x18] sm:$0xf]
    %v121 = vld [vmem:[#allocation6 + $0x1c] sm:$0xf]
    %v122 = vld [vmem:[#allocation6 + $0x20] sm:$0xf]
    %v123 = vld [vmem:[#allocation6 + $0x24] sm:$0xf]
    %v124 = vld [vmem:[#allocation6 + $0x28] sm:$0xf]
    %v125 = vld [vmem:[#allocation6 + $0x2c] sm:$0xf]
    %v126 = vld [vmem:[#allocation6 + $0x30] sm:$0xf]
    %v127 = vld [vmem:[#allocation6 + $0x34] sm:$0xf]
    %v128 = vld [vmem:[#allocation6 + $0x38] sm:$0xf]
    %v129 = vld [vmem:[#allocation6 + $0x3c] sm:$0xf]
    %v130 = vld [vmem:[%s2] sm:$0x1]
    %v132 = vperm.slane %v130, 0
    %v150 = vunpack.c.l.b16 %v114
    %v151 = vunpack.c.l.b16 %v115
    %v152 = vunpack.c.l.b16 %v116
    %v153 = vunpack.c.l.b16 %v117
    %v154 = vunpack.c.l.b16 %v118
    %v155 = vunpack.c.l.b16 %v119
    %v156 = vunpack.c.l.b16 %v120
    %v157 = vunpack.c.l.b16 %v121
    %v158 = vunpack.c.l.b16 %v122
    %v159 = vunpack.c.l.b16 %v123
    %v160 = vunpack.c.l.b16 %v124
    %v161 = vunpack.c.l.b16 %v125
    %v162 = vunpack.c.l.b16 %v126
    %v163 = vunpack.c.l.b16 %v127
    %v164 = vunpack.c.l.b16 %v128
    %v165 = vunpack.c.l.b16 %v129
    %v166 = vpack.c.b16 %v151, %v150
    %v167 = vpack.c.b16 %v153, %v152
    %v168 = vpack.c.b16 %v155, %v154
    %v169 = vpack.c.b16 %v157, %v156
    %v170 = vpack.c.b16 %v159, %v158
    %v171 = vpack.c.b16 %v161, %v160
    %v172 = vpack.c.b16 %v163, %v162
    %v173 = vpack.c.b16 %v165, %v164
    %182 = vmatpush.bf16.msra.mxu0 %v173
    %183 = vmatpush.bf16.msra.mxu0 %v172
    %184 = vmatpush.bf16.msra.mxu0 %v171
    %185 = vmatpush.bf16.msra.mxu0 %v170
    %186 = vmatpush.bf16.msra.mxu0 %v169
    %187 = vmatpush.bf16.msra.mxu0 %v168
    %188 = vmatpush.bf16.msra.mxu0 %v167
    %189 = vmatpush.bf16.msra.mxu0 %v166
    %190 = vmatmul.bf16.gmra.mxu0 %v106
    %v191 = vpop.f32.mrf.mxu0
    %v192 = vadd.f32 %v132, %v191
    %v193 = vpop.f32.mrf.mxu0
    %v194 = vadd.f32 %v132, %v193
    %195 = vmatmul.bf16.gmra.mxu0 %v107
    %v196 = vpop.f32.mrf.mxu0
    %v197 = vadd.f32 %v132, %v196
    %v198 = vpop.f32.mrf.mxu0
    %v199 = vadd.f32 %v132, %v198
    %200 = vmatmul.bf16.gmra.mxu0 %v108
    %v201 = vpop.f32.mrf.mxu0
    %v202 = vadd.f32 %v132, %v201
    %v203 = vpop.f32.mrf.mxu0
    %v204 = vadd.f32 %v132, %v203
    %205 = vmatmul.bf16.gmra.mxu0 %v109
    %v206 = vpop.f32.mrf.mxu0
    %v207 = vadd.f32 %v132, %v206
    %v208 = vpop.f32.mrf.mxu0
    %v209 = vadd.f32 %v132, %v208
    %210 = vmatmul.bf16.gmra.mxu0 %v110
    %v211 = vpop.f32.mrf.mxu0
    %v212 = vadd.f32 %v132, %v211
    %v213 = vpop.f32.mrf.mxu0
    %v214 = vadd.f32 %v132, %v213
    %215 = vmatmul.bf16.gmra.mxu0 %v111
    %v216 = vpop.f32.mrf.mxu0
    %v217 = vadd.f32 %v132, %v216
    %v218 = vpop.f32.mrf.mxu0
    %v219 = vadd.f32 %v132, %v218
    %220 = vmatmul.bf16.gmra.mxu0 %v112
    %v221 = vpop.f32.mrf.mxu0
    %v222 = vadd.f32 %v132, %v221
    %v223 = vpop.f32.mrf.mxu0
    %v224 = vadd.f32 %v132, %v223
    %225 = vmatmul.bf16.gmra.mxu0 %v113
    %v226 = vpop.f32.mrf.mxu0
    %v227 = vadd.f32 %v132, %v226
    %v228 = vpop.f32.mrf.mxu0
    %v229 = vadd.f32 %v132, %v228
    %230 = vdwg.mxu0
    %231 = vst [vmem:[#allocation2] sm:$0xff] 0.0
    %232 = vst [vmem:[#allocation2 + $0x8] sm:$0x3] 0.0
    %233 = vst [vmem:[#allocation2 + $0x10] sm:$0xff] 0.0
    %234 = vst [vmem:[#allocation2 + $0x18] sm:$0x3] 0.0
    %235 = vst [vmem:[#allocation2 + $0x20] sm:$0xff] 0.0
    %236 = vst [vmem:[#allocation2 + $0x28] sm:$0x3] 0.0
    %237 = vst [vmem:[#allocation2 + $0x30] sm:$0xff] 0.0
    %238 = vst [vmem:[#allocation2 + $0x38] sm:$0x3] 0.0
    %239 = vst [vmem:[#allocation2 + $0x40] sm:$0xff] 0.0
    %240 = vst [vmem:[#allocation2 + $0x48] sm:$0x3] 0.0
    %241 = vst [vmem:[#allocation2 + $0x50] sm:$0xff] 0.0
    %242 = vst [vmem:[#allocation2 + $0x58] sm:$0x3] 0.0
    %243 = vst [vmem:[#allocation2 + $0x60] sm:$0xff] 0.0
    %244 = vst [vmem:[#allocation2 + $0x68] sm:$0x3] 0.0
    %245 = vst [vmem:[#allocation2 + $0x70] sm:$0xff] 0.0
    %246 = vst [vmem:[#allocation2 + $0x78] sm:$0x3] 0.0
    %247 = vst [vmem:[#allocation2 + $0x80] sm:$0xff] 0.0
    %248 = vst [vmem:[#allocation2 + $0x88] sm:$0x3] 0.0
    %249 = vst [vmem:[#allocation2 + $0x90] sm:$0xff] 0.0
    %250 = vst [vmem:[#allocation2 + $0x98] sm:$0x3] 0.0
    %251 = vst [vmem:[#allocation2 + $0xa0] sm:$0xff] 0.0
    %252 = vst [vmem:[#allocation2 + $0xa8] sm:$0x3] 0.0
    %253 = vst [vmem:[#allocation2 + $0xb0] sm:$0xff] 0.0
    %254 = vst [vmem:[#allocation2 + $0xb8] sm:$0x3] 0.0
    %255 = vst [vmem:[#allocation2 + $0xc0] sm:$0xff] 0.0
    %256 = vst [vmem:[#allocation2 + $0xc8] sm:$0x3] 0.0
    %257 = vst [vmem:[#allocation2 + $0xd0] sm:$0xff] 0.0
    %258 = vst [vmem:[#allocation2 + $0xd8] sm:$0x3] 0.0
    %259 = vst [vmem:[#allocation2 + $0xe0] sm:$0xff] 0.0
    %260 = vst [vmem:[#allocation2 + $0xe8] sm:$0x3] 0.0
    %261 = vst [vmem:[#allocation2 + $0xf0] sm:$0xff] 0.0
    %262 = vst [vmem:[#allocation2 + $0xf8] sm:$0x3] 0.0
    %263 = vst [vmem:[#allocation2 + $0x100] sm:$0xff] 0.0
    %264 = vst [vmem:[#allocation2 + $0x108] sm:$0x3] 0.0
    %265 = vst [vmem:[#allocation2 + $0x110] sm:$0xff] 0.0
    %266 = vst [vmem:[#allocation2 + $0x118] sm:$0x3] 0.0
    %267 = vst [vmem:[#allocation2 + $0x120] sm:$0xff] 0.0
    %268 = vst [vmem:[#allocation2 + $0x128] sm:$0x3] 0.0
    %269 = vst [vmem:[#allocation2 + $0x130] sm:$0xff] 0.0
    %270 = vst [vmem:[#allocation2 + $0x138] sm:$0x3] 0.0
    %s271 = scalar_lea.vmem [#allocation2], 16
    %272 = vst [vmem:[%s271 + $0x1] sm:$0xff] %v192
    %273 = vst [vmem:[%s271 + $0x11] sm:$0xff] %v194
    %274 = vst [vmem:[%s271 + $0x21] sm:$0xff] %v197
    %275 = vst [vmem:[%s271 + $0x31] sm:$0xff] %v199
    %276 = vst [vmem:[%s271 + $0x41] sm:$0xff] %v202
    %277 = vst [vmem:[%s271 + $0x51] sm:$0xff] %v204
    %278 = vst [vmem:[%s271 + $0x61] sm:$0xff] %v207
    %279 = vst [vmem:[%s271 + $0x71] sm:$0xff] %v209
    %280 = vst [vmem:[%s271 + $0xa1] sm:$0xff] %v212
    %281 = vst [vmem:[%s271 + $0xb1] sm:$0xff] %v214
    %282 = vst [vmem:[%s271 + $0xc1] sm:$0xff] %v217
    %283 = vst [vmem:[%s271 + $0xd1] sm:$0xff] %v219
    %284 = vst [vmem:[%s271 + $0xe1] sm:$0xff] %v222
    %285 = vst [vmem:[%s271 + $0xf1] sm:$0xff] %v224
    %286 = vst [vmem:[%s271 + $0x101] sm:$0xff] %v227
    %287 = vst [vmem:[%s271 + $0x111] sm:$0xff] %v229
    %v288 = vld [vmem:[#allocation8] sm:$0xff]
    %v289 = vld [vmem:[#allocation8 + $0x8] sm:$0x1]
    %v290 = vld [vmem:[#allocation2] sm:$0xff]
    %v291 = vld [vmem:[#allocation2 + $0x10] sm:$0xff]
    %v292 = vld [vmem:[#allocation2 + $0x20] sm:$0xff]
    %v293 = vld [vmem:[#allocation2 + $0x30] sm:$0xff]
    %v294 = vld [vmem:[#allocation2 + $0x40] sm:$0xff]
    %v295 = vld [vmem:[#allocation2 + $0x50] sm:$0xff]
    %v296 = vld [vmem:[#allocation2 + $0x60] sm:$0xff]
    %v297 = vld [vmem:[#allocation2 + $0x70] sm:$0xff]
    %v298 = vld [vmem:[#allocation2 + $0xa0] sm:$0xff]
    %v299 = vld [vmem:[#allocation2 + $0xb0] sm:$0xff]
    %v300 = vld [vmem:[#allocation2 + $0xc0] sm:$0xff]
    %v301 = vld [vmem:[#allocation2 + $0xd0] sm:$0xff]
    %v302 = vld [vmem:[#allocation2 + $0xe0] sm:$0xff]
    %v303 = vld [vmem:[#allocation2 + $0xf0] sm:$0xff]
    %v304 = vld [vmem:[#allocation2 + $0x100] sm:$0xff]
    %v305 = vld [vmem:[#allocation2 + $0x110] sm:$0xff]
    %v306 = vperm.slane %v288, 0
    %v307 = vmul.f32 %v290, %v306
    %v308 = vmul.f32 %v291, %v306
    %v309 = vmul.f32 %v292, %v306
    %v310 = vmul.f32 %v293, %v306
    %v311 = vmul.f32 %v294, %v306
    %v312 = vmul.f32 %v295, %v306
    %v313 = vmul.f32 %v296, %v306
    %v314 = vmul.f32 %v297, %v306
    %v315 = vmul.f32 %v298, %v306
    %v316 = vmul.f32 %v299, %v306
    %v317 = vmul.f32 %v300, %v306
    %v318 = vmul.f32 %v301, %v306
    %v319 = vmul.f32 %v302, %v306
    %v320 = vmul.f32 %v303, %v306
    %v321 = vmul.f32 %v304, %v306
    %v322 = vmul.f32 %v305, %v306
    %v323 = vadd.f32 %v307, 0.0
    %v324 = vadd.f32 %v308, 0.0
    %v325 = vadd.f32 %v309, 0.0
    %v326 = vadd.f32 %v310, 0.0
    %v327 = vadd.f32 %v311, 0.0
    %v328 = vadd.f32 %v312, 0.0
    %v329 = vadd.f32 %v313, 0.0
    %v330 = vadd.f32 %v314, 0.0
    %v331 = vadd.f32 %v315, 0.0
    %v332 = vadd.f32 %v316, 0.0
    %v333 = vadd.f32 %v317, 0.0
    %v334 = vadd.f32 %v318, 0.0
    %v335 = vadd.f32 %v319, 0.0
    %v336 = vadd.f32 %v320, 0.0
    %v337 = vadd.f32 %v321, 0.0
    %v338 = vadd.f32 %v322, 0.0
    %v339 = vld [vmem:[#allocation2 + $0x1] sm:$0xff]
    %v340 = vld [vmem:[#allocation2 + $0x11] sm:$0xff]
    %v341 = vld [vmem:[#allocation2 + $0x21] sm:$0xff]
    %v342 = vld [vmem:[#allocation2 + $0x31] sm:$0xff]
    %v343 = vld [vmem:[#allocation2 + $0x41] sm:$0xff]
    %v344 = vld [vmem:[#allocation2 + $0x51] sm:$0xff]
    %v345 = vld [vmem:[#allocation2 + $0x61] sm:$0xff]
    %v346 = vld [vmem:[#allocation2 + $0x71] sm:$0xff]
    %v347 = vld [vmem:[#allocation2 + $0xa1] sm:$0xff]
    %v348 = vld [vmem:[#allocation2 + $0xb1] sm:$0xff]
    %v349 = vld [vmem:[#allocation2 + $0xc1] sm:$0xff]
    %v350 = vld [vmem:[#allocation2 + $0xd1] sm:$0xff]
    %v351 = vld [vmem:[#allocation2 + $0xe1] sm:$0xff]
    %v352 = vld [vmem:[#allocation2 + $0xf1] sm:$0xff]
    %v353 = vld [vmem:[#allocation2 + $0x101] sm:$0xff]
    %v354 = vld [vmem:[#allocation2 + $0x111] sm:$0xff]
    %v355 = vperm.slane %v288, 1
    %v356 = vmul.f32 %v339, %v355
    %v357 = vmul.f32 %v340, %v355
    %v358 = vmul.f32 %v341, %v355
    %v359 = vmul.f32 %v342, %v355
    %v360 = vmul.f32 %v343, %v355
    %v361 = vmul.f32 %v344, %v355
    %v362 = vmul.f32 %v345, %v355
    %v363 = vmul.f32 %v346, %v355
    %v364 = vmul.f32 %v347, %v355
    %v365 = vmul.f32 %v348, %v355
    %v366 = vmul.f32 %v349, %v355
    %v367 = vmul.f32 %v350, %v355
    %v368 = vmul.f32 %v351, %v355
    %v369 = vmul.f32 %v352, %v355
    %v370 = vmul.f32 %v353, %v355
    %v371 = vmul.f32 %v354, %v355
    %v372 = vadd.f32 %v323, %v356
    %v373 = vadd.f32 %v324, %v357
    %v374 = vadd.f32 %v325, %v358
    %v375 = vadd.f32 %v326, %v359
    %v376 = vadd.f32 %v327, %v360
    %v377 = vadd.f32 %v328, %v361
    %v378 = vadd.f32 %v329, %v362
    %v379 = vadd.f32 %v330, %v363
    %v380 = vadd.f32 %v331, %v364
    %v381 = vadd.f32 %v332, %v365
    %v382 = vadd.f32 %v333, %v366
    %v383 = vadd.f32 %v334, %v367
    %v384 = vadd.f32 %v335, %v368
    %v385 = vadd.f32 %v336, %v369
    %v386 = vadd.f32 %v337, %v370
    %v387 = vadd.f32 %v338, %v371
    %v388 = vld [vmem:[#allocation2 + $0x2] sm:$0xff]
    %v389 = vld [vmem:[#allocation2 + $0x12] sm:$0xff]
    %v390 = vld [vmem:[#allocation2 + $0x22] sm:$0xff]
    %v391 = vld [vmem:[#allocation2 + $0x32] sm:$0xff]
    %v392 = vld [vmem:[#allocation2 + $0x42] sm:$0xff]
    %v393 = vld [vmem:[#allocation2 + $0x52] sm:$0xff]
    %v394 = vld [vmem:[#allocation2 + $0x62] sm:$0xff]
    %v395 = vld [vmem:[#allocation2 + $0x72] sm:$0xff]
    %v396 = vld [vmem:[#allocation2 + $0xa2] sm:$0xff]
    %v397 = vld [vmem:[#allocation2 + $0xb2] sm:$0xff]
    %v398 = vld [vmem:[#allocation2 + $0xc2] sm:$0xff]
    %v399 = vld [vmem:[#allocation2 + $0xd2] sm:$0xff]
    %v400 = vld [vmem:[#allocation2 + $0xe2] sm:$0xff]
    %v401 = vld [vmem:[#allocation2 + $0xf2] sm:$0xff]
    %v402 = vld [vmem:[#allocation2 + $0x102] sm:$0xff]
    %v403 = vld [vmem:[#allocation2 + $0x112] sm:$0xff]
    %v404 = vperm.slane %v288, 2
    %v405 = vmul.f32 %v388, %v404
    %v406 = vmul.f32 %v389, %v404
    %v407 = vmul.f32 %v390, %v404
    %v408 = vmul.f32 %v391, %v404
    %v409 = vmul.f32 %v392, %v404
    %v410 = vmul.f32 %v393, %v404
    %v411 = vmul.f32 %v394, %v404
    %v412 = vmul.f32 %v395, %v404
    %v413 = vmul.f32 %v396, %v404
    %v414 = vmul.f32 %v397, %v404
    %v415 = vmul.f32 %v398, %v404
    %v416 = vmul.f32 %v399, %v404
    %v417 = vmul.f32 %v400, %v404
    %v418 = vmul.f32 %v401, %v404
    %v419 = vmul.f32 %v402, %v404
    %v420 = vmul.f32 %v403, %v404
    %v421 = vadd.f32 %v372, %v405
    %v422 = vadd.f32 %v373, %v406
    %v423 = vadd.f32 %v374, %v407
    %v424 = vadd.f32 %v375, %v408
    %v425 = vadd.f32 %v376, %v409
    %v426 = vadd.f32 %v377, %v410
    %v427 = vadd.f32 %v378, %v411
    %v428 = vadd.f32 %v379, %v412
    %v429 = vadd.f32 %v380, %v413
    %v430 = vadd.f32 %v381, %v414
    %v431 = vadd.f32 %v382, %v415
    %v432 = vadd.f32 %v383, %v416
    %v433 = vadd.f32 %v384, %v417
    %v434 = vadd.f32 %v385, %v418
    %v435 = vadd.f32 %v386, %v419
    %v436 = vadd.f32 %v387, %v420
    %v437 = vld [vmem:[%s271] sm:$0xff]
    %v438 = vld [vmem:[%s271 + $0x10] sm:$0xff]
    %v439 = vld [vmem:[%s271 + $0x20] sm:$0xff]
    %v440 = vld [vmem:[%s271 + $0x30] sm:$0xff]
    %v441 = vld [vmem:[%s271 + $0x40] sm:$0xff]
    %v442 = vld [vmem:[%s271 + $0x50] sm:$0xff]
    %v443 = vld [vmem:[%s271 + $0x60] sm:$0xff]
    %v444 = vld [vmem:[%s271 + $0x70] sm:$0xff]
    %v445 = vld [vmem:[%s271 + $0xa0] sm:$0xff]
    %v446 = vld [vmem:[%s271 + $0xb0] sm:$0xff]
    %v447 = vld [vmem:[%s271 + $0xc0] sm:$0xff]
    %v448 = vld [vmem:[%s271 + $0xd0] sm:$0xff]
    %v449 = vld [vmem:[%s271 + $0xe0] sm:$0xff]
    %v450 = vld [vmem:[%s271 + $0xf0] sm:$0xff]
    %v451 = vld [vmem:[%s271 + $0x100] sm:$0xff]
    %v452 = vld [vmem:[%s271 + $0x110] sm:$0xff]
    %v453 = vperm.slane %v288, 3
    %v454 = vmul.f32 %v437, %v453
    %v455 = vmul.f32 %v438, %v453
    %v456 = vmul.f32 %v439, %v453
    %v457 = vmul.f32 %v440, %v453
    %v458 = vmul.f32 %v441, %v453
    %v459 = vmul.f32 %v442, %v453
    %v460 = vmul.f32 %v443, %v453
    %v461 = vmul.f32 %v444, %v453
    %v462 = vmul.f32 %v445, %v453
    %v463 = vmul.f32 %v446, %v453
    %v464 = vmul.f32 %v447, %v453
    %v465 = vmul.f32 %v448, %v453
    %v466 = vmul.f32 %v449, %v453
    %v467 = vmul.f32 %v450, %v453
    %v468 = vmul.f32 %v451, %v453
    %v469 = vmul.f32 %v452, %v453
    %v470 = vadd.f32 %v421, %v454
    %v471 = vadd.f32 %v422, %v455
    %v472 = vadd.f32 %v423, %v456
    %v473 = vadd.f32 %v424, %v457
    %v474 = vadd.f32 %v425, %v458
    %v475 = vadd.f32 %v426, %v459
    %v476 = vadd.f32 %v427, %v460
    %v477 = vadd.f32 %v428, %v461
    %v478 = vadd.f32 %v429, %v462
    %v479 = vadd.f32 %v430, %v463
    %v480 = vadd.f32 %v431, %v464
    %v481 = vadd.f32 %v432, %v465
    %v482 = vadd.f32 %v433, %v466
    %v483 = vadd.f32 %v434, %v467
    %v484 = vadd.f32 %v435, %v468
    %v485 = vadd.f32 %v436, %v469
    %v486 = vld [vmem:[%s271 + $0x1] sm:$0xff]
    %v487 = vld [vmem:[%s271 + $0x11] sm:$0xff]
    %v488 = vld [vmem:[%s271 + $0x21] sm:$0xff]
    %v489 = vld [vmem:[%s271 + $0x31] sm:$0xff]
    %v490 = vld [vmem:[%s271 + $0x41] sm:$0xff]
    %v491 = vld [vmem:[%s271 + $0x51] sm:$0xff]
    %v492 = vld [vmem:[%s271 + $0x61] sm:$0xff]
    %v493 = vld [vmem:[%s271 + $0x71] sm:$0xff]
    %v494 = vld [vmem:[%s271 + $0xa1] sm:$0xff]
    %v495 = vld [vmem:[%s271 + $0xb1] sm:$0xff]
    %v496 = vld [vmem:[%s271 + $0xc1] sm:$0xff]
    %v497 = vld [vmem:[%s271 + $0xd1] sm:$0xff]
    %v498 = vld [vmem:[%s271 + $0xe1] sm:$0xff]
    %v499 = vld [vmem:[%s271 + $0xf1] sm:$0xff]
    %v500 = vld [vmem:[%s271 + $0x101] sm:$0xff]
    %v501 = vld [vmem:[%s271 + $0x111] sm:$0xff]
    %v502 = vperm.slane %v288, 4
    %v503 = vmul.f32 %v486, %v502
    %v504 = vmul.f32 %v487, %v502
    %v505 = vmul.f32 %v488, %v502
    %v506 = vmul.f32 %v489, %v502
    %v507 = vmul.f32 %v490, %v502
    %v508 = vmul.f32 %v491, %v502
    %v509 = vmul.f32 %v492, %v502
    %v510 = vmul.f32 %v493, %v502
    %v511 = vmul.f32 %v494, %v502
    %v512 = vmul.f32 %v495, %v502
    %v513 = vmul.f32 %v496, %v502
    %v514 = vmul.f32 %v497, %v502
    %v515 = vmul.f32 %v498, %v502
    %v516 = vmul.f32 %v499, %v502
    %v517 = vmul.f32 %v500, %v502
    %v518 = vmul.f32 %v501, %v502
    %v519 = vadd.f32 %v470, %v503
    %v520 = vadd.f32 %v471, %v504
    %v521 = vadd.f32 %v472, %v505
    %v522 = vadd.f32 %v473, %v506
    %v523 = vadd.f32 %v474, %v507
    %v524 = vadd.f32 %v475, %v508
    %v525 = vadd.f32 %v476, %v509
    %v526 = vadd.f32 %v477, %v510
    %v527 = vadd.f32 %v478, %v511
    %v528 = vadd.f32 %v479, %v512
    %v529 = vadd.f32 %v480, %v513
    %v530 = vadd.f32 %v481, %v514
    %v531 = vadd.f32 %v482, %v515
    %v532 = vadd.f32 %v483, %v516
    %v533 = vadd.f32 %v484, %v517
    %v534 = vadd.f32 %v485, %v518
    %v535 = vld [vmem:[%s271 + $0x2] sm:$0xff]
    %v536 = vld [vmem:[%s271 + $0x12] sm:$0xff]
    %v537 = vld [vmem:[%s271 + $0x22] sm:$0xff]
    %v538 = vld [vmem:[%s271 + $0x32] sm:$0xff]
    %v539 = vld [vmem:[%s271 + $0x42] sm:$0xff]
    %v540 = vld [vmem:[%s271 + $0x52] sm:$0xff]
    %v541 = vld [vmem:[%s271 + $0x62] sm:$0xff]
    %v542 = vld [vmem:[%s271 + $0x72] sm:$0xff]
    %v543 = vld [vmem:[%s271 + $0xa2] sm:$0xff]
    %v544 = vld [vmem:[%s271 + $0xb2] sm:$0xff]
    %v545 = vld [vmem:[%s271 + $0xc2] sm:$0xff]
    %v546 = vld [vmem:[%s271 + $0xd2] sm:$0xff]
    %v547 = vld [vmem:[%s271 + $0xe2] sm:$0xff]
    %v548 = vld [vmem:[%s271 + $0xf2] sm:$0xff]
    %v549 = vld [vmem:[%s271 + $0x102] sm:$0xff]
    %v550 = vld [vmem:[%s271 + $0x112] sm:$0xff]
    %v551 = vperm.slane %v288, 5
    %v552 = vmul.f32 %v535, %v551
    %v553 = vmul.f32 %v536, %v551
    %v554 = vmul.f32 %v537, %v551
    %v555 = vmul.f32 %v538, %v551
    %v556 = vmul.f32 %v539, %v551
    %v557 = vmul.f32 %v540, %v551
    %v558 = vmul.f32 %v541, %v551
    %v559 = vmul.f32 %v542, %v551
    %v560 = vmul.f32 %v543, %v551
    %v561 = vmul.f32 %v544, %v551
    %v562 = vmul.f32 %v545, %v551
    %v563 = vmul.f32 %v546, %v551
    %v564 = vmul.f32 %v547, %v551
    %v565 = vmul.f32 %v548, %v551
    %v566 = vmul.f32 %v549, %v551
    %v567 = vmul.f32 %v550, %v551
    %v568 = vadd.f32 %v519, %v552
    %v569 = vadd.f32 %v520, %v553
    %v570 = vadd.f32 %v521, %v554
    %v571 = vadd.f32 %v522, %v555
    %v572 = vadd.f32 %v523, %v556
    %v573 = vadd.f32 %v524, %v557
    %v574 = vadd.f32 %v525, %v558
    %v575 = vadd.f32 %v526, %v559
    %v576 = vadd.f32 %v527, %v560
    %v577 = vadd.f32 %v528, %v561
    %v578 = vadd.f32 %v529, %v562
    %v579 = vadd.f32 %v530, %v563
    %v580 = vadd.f32 %v531, %v564
    %v581 = vadd.f32 %v532, %v565
    %v582 = vadd.f32 %v533, %v566
    %v583 = vadd.f32 %v534, %v567
    %s584 = scalar_lea.vmem [#allocation2], 32
    %v585 = vld [vmem:[%s584] sm:$0xff]
    %v586 = vld [vmem:[%s584 + $0x10] sm:$0xff]
    %v587 = vld [vmem:[%s584 + $0x20] sm:$0xff]
    %v588 = vld [vmem:[%s584 + $0x30] sm:$0xff]
    %v589 = vld [vmem:[%s584 + $0x40] sm:$0xff]
    %v590 = vld [vmem:[%s584 + $0x50] sm:$0xff]
    %v591 = vld [vmem:[%s584 + $0x60] sm:$0xff]
    %v592 = vld [vmem:[%s584 + $0x70] sm:$0xff]
    %v593 = vld [vmem:[%s584 + $0xa0] sm:$0xff]
    %v594 = vld [vmem:[%s584 + $0xb0] sm:$0xff]
    %v595 = vld [vmem:[%s584 + $0xc0] sm:$0xff]
    %v596 = vld [vmem:[%s584 + $0xd0] sm:$0xff]
    %v597 = vld [vmem:[%s584 + $0xe0] sm:$0xff]
    %v598 = vld [vmem:[%s584 + $0xf0] sm:$0xff]
    %v599 = vld [vmem:[%s584 + $0x100] sm:$0xff]
    %v600 = vld [vmem:[%s584 + $0x110] sm:$0xff]
    %v601 = vperm.slane %v288, 6
    %v602 = vmul.f32 %v585, %v601
    %v603 = vmul.f32 %v586, %v601
    %v604 = vmul.f32 %v587, %v601
    %v605 = vmul.f32 %v588, %v601
    %v606 = vmul.f32 %v589, %v601
    %v607 = vmul.f32 %v590, %v601
    %v608 = vmul.f32 %v591, %v601
    %v609 = vmul.f32 %v592, %v601
    %v610 = vmul.f32 %v593, %v601
    %v611 = vmul.f32 %v594, %v601
    %v612 = vmul.f32 %v595, %v601
    %v613 = vmul.f32 %v596, %v601
    %v614 = vmul.f32 %v597, %v601
    %v615 = vmul.f32 %v598, %v601
    %v616 = vmul.f32 %v599, %v601
    %v617 = vmul.f32 %v600, %v601
    %v618 = vadd.f32 %v568, %v602
    %v619 = vadd.f32 %v569, %v603
    %v620 = vadd.f32 %v570, %v604
    %v621 = vadd.f32 %v571, %v605
    %v622 = vadd.f32 %v572, %v606
    %v623 = vadd.f32 %v573, %v607
    %v624 = vadd.f32 %v574, %v608
    %v625 = vadd.f32 %v575, %v609
    %v626 = vadd.f32 %v576, %v610
    %v627 = vadd.f32 %v577, %v611
    %v628 = vadd.f32 %v578, %v612
    %v629 = vadd.f32 %v579, %v613
    %v630 = vadd.f32 %v580, %v614
    %v631 = vadd.f32 %v581, %v615
    %v632 = vadd.f32 %v582, %v616
    %v633 = vadd.f32 %v583, %v617
    %v634 = vld [vmem:[%s584 + $0x1] sm:$0xff]
    %v635 = vld [vmem:[%s584 + $0x11] sm:$0xff]
    %v636 = vld [vmem:[%s584 + $0x21] sm:$0xff]
    %v637 = vld [vmem:[%s584 + $0x31] sm:$0xff]
    %v638 = vld [vmem:[%s584 + $0x41] sm:$0xff]
    %v639 = vld [vmem:[%s584 + $0x51] sm:$0xff]
    %v640 = vld [vmem:[%s584 + $0x61] sm:$0xff]
    %v641 = vld [vmem:[%s584 + $0x71] sm:$0xff]
    %v642 = vld [vmem:[%s584 + $0xa1] sm:$0xff]
    %v643 = vld [vmem:[%s584 + $0xb1] sm:$0xff]
    %v644 = vld [vmem:[%s584 + $0xc1] sm:$0xff]
    %v645 = vld [vmem:[%s584 + $0xd1] sm:$0xff]
    %v646 = vld [vmem:[%s584 + $0xe1] sm:$0xff]
    %v647 = vld [vmem:[%s584 + $0xf1] sm:$0xff]
    %v648 = vld [vmem:[%s584 + $0x101] sm:$0xff]
    %v649 = vld [vmem:[%s584 + $0x111] sm:$0xff]
    %v650 = vperm.slane %v288, 7
    %v651 = vmul.f32 %v634, %v650
    %v652 = vmul.f32 %v635, %v650
    %v653 = vmul.f32 %v636, %v650
    %v654 = vmul.f32 %v637, %v650
    %v655 = vmul.f32 %v638, %v650
    %v656 = vmul.f32 %v639, %v650
    %v657 = vmul.f32 %v640, %v650
    %v658 = vmul.f32 %v641, %v650
    %v659 = vmul.f32 %v642, %v650
    %v660 = vmul.f32 %v643, %v650
    %v661 = vmul.f32 %v644, %v650
    %v662 = vmul.f32 %v645, %v650
    %v663 = vmul.f32 %v646, %v650
    %v664 = vmul.f32 %v647, %v650
    %v665 = vmul.f32 %v648, %v650
    %v666 = vmul.f32 %v649, %v650
    %v667 = vadd.f32 %v618, %v651
    %v668 = vadd.f32 %v619, %v652
    %v669 = vadd.f32 %v620, %v653
    %v670 = vadd.f32 %v621, %v654
    %v671 = vadd.f32 %v622, %v655
    %v672 = vadd.f32 %v623, %v656
    %v673 = vadd.f32 %v624, %v657
    %v674 = vadd.f32 %v625, %v658
    %v675 = vadd.f32 %v626, %v659
    %v676 = vadd.f32 %v627, %v660
    %v677 = vadd.f32 %v628, %v661
    %v678 = vadd.f32 %v629, %v662
    %v679 = vadd.f32 %v630, %v663
    %v680 = vadd.f32 %v631, %v664
    %v681 = vadd.f32 %v632, %v665
    %v682 = vadd.f32 %v633, %v666
    %v683 = vld [vmem:[%s584 + $0x2] sm:$0xff]
    %v684 = vld [vmem:[%s584 + $0x12] sm:$0xff]
    %v685 = vld [vmem:[%s584 + $0x22] sm:$0xff]
    %v686 = vld [vmem:[%s584 + $0x32] sm:$0xff]
    %v687 = vld [vmem:[%s584 + $0x42] sm:$0xff]
    %v688 = vld [vmem:[%s584 + $0x52] sm:$0xff]
    %v689 = vld [vmem:[%s584 + $0x62] sm:$0xff]
    %v690 = vld [vmem:[%s584 + $0x72] sm:$0xff]
    %v691 = vld [vmem:[%s584 + $0xa2] sm:$0xff]
    %v692 = vld [vmem:[%s584 + $0xb2] sm:$0xff]
    %v693 = vld [vmem:[%s584 + $0xc2] sm:$0xff]
    %v694 = vld [vmem:[%s584 + $0xd2] sm:$0xff]
    %v695 = vld [vmem:[%s584 + $0xe2] sm:$0xff]
    %v696 = vld [vmem:[%s584 + $0xf2] sm:$0xff]
    %v697 = vld [vmem:[%s584 + $0x102] sm:$0xff]
    %v698 = vld [vmem:[%s584 + $0x112] sm:$0xff]
    %v699 = vperm.slane %v289, 0
    %v700 = vmul.f32 %v683, %v699
    %v701 = vmul.f32 %v684, %v699
    %v702 = vmul.f32 %v685, %v699
    %v703 = vmul.f32 %v686, %v699
    %v704 = vmul.f32 %v687, %v699
    %v705 = vmul.f32 %v688, %v699
    %v706 = vmul.f32 %v689, %v699
    %v707 = vmul.f32 %v690, %v699
    %v708 = vmul.f32 %v691, %v699
    %v709 = vmul.f32 %v692, %v699
    %v710 = vmul.f32 %v693, %v699
    %v711 = vmul.f32 %v694, %v699
    %v712 = vmul.f32 %v695, %v699
    %v713 = vmul.f32 %v696, %v699
    %v714 = vmul.f32 %v697, %v699
    %v715 = vmul.f32 %v698, %v699
    %v716 = vadd.f32 %v667, %v700
    %v717 = vadd.f32 %v668, %v701
    %v718 = vadd.f32 %v669, %v702
    %v719 = vadd.f32 %v670, %v703
    %v720 = vadd.f32 %v671, %v704
    %v721 = vadd.f32 %v672, %v705
    %v722 = vadd.f32 %v673, %v706
    %v723 = vadd.f32 %v674, %v707
    %v724 = vadd.f32 %v675, %v708
    %v725 = vadd.f32 %v676, %v709
    %v726 = vadd.f32 %v677, %v710
    %v727 = vadd.f32 %v678, %v711
    %v728 = vadd.f32 %v679, %v712
    %v729 = vadd.f32 %v680, %v713
    %v730 = vadd.f32 %v681, %v714
    %v731 = vadd.f32 %v682, %v715
    %v732 = vld [vmem:[%s4] sm:$0x1]
    %v734 = vperm.slane %v732, 0
    %v736 = vadd.f32 %v716, %v734
    %v737 = vadd.f32 %v717, %v734
    %v738 = vadd.f32 %v718, %v734
    %v739 = vadd.f32 %v719, %v734
    %v740 = vadd.f32 %v720, %v734
    %v741 = vadd.f32 %v721, %v734
    %v742 = vadd.f32 %v722, %v734
    %v743 = vadd.f32 %v723, %v734
    %v744 = vadd.f32 %v724, %v734
    %v745 = vadd.f32 %v725, %v734
    %v746 = vadd.f32 %v726, %v734
    %v747 = vadd.f32 %v727, %v734
    %v748 = vadd.f32 %v728, %v734
    %v749 = vadd.f32 %v729, %v734
    %v750 = vadd.f32 %v730, %v734
    %v751 = vadd.f32 %v731, %v734
    %v752 = vmul.f32 %v736, 0.5
    %v753 = vmul.f32 %v737, 0.5
    %v754 = vmul.f32 %v738, 0.5
    %v755 = vmul.f32 %v739, 0.5
    %v756 = vmul.f32 %v740, 0.5
    %v757 = vmul.f32 %v741, 0.5
    %v758 = vmul.f32 %v742, 0.5
    %v759 = vmul.f32 %v743, 0.5
    %v760 = vmul.f32 %v744, 0.5
    %v761 = vmul.f32 %v745, 0.5
    %v762 = vmul.f32 %v746, 0.5
    %v763 = vmul.f32 %v747, 0.5
    %v764 = vmul.f32 %v748, 0.5
    %v765 = vmul.f32 %v749, 0.5
    %v766 = vmul.f32 %v750, 0.5
    %v767 = vmul.f32 %v751, 0.5
    %v768 = vmul.f32 %v736, 0.70710677
    %v769 = vmul.f32 %v737, 0.70710677
    %v770 = vmul.f32 %v738, 0.70710677
    %v771 = vmul.f32 %v739, 0.70710677
    %v772 = vmul.f32 %v740, 0.70710677
    %v773 = vmul.f32 %v741, 0.70710677
    %v774 = vmul.f32 %v742, 0.70710677
    %v775 = vmul.f32 %v743, 0.70710677
    %v776 = vmul.f32 %v744, 0.70710677
    %v777 = vmul.f32 %v745, 0.70710677
    %v778 = vmul.f32 %v746, 0.70710677
    %v779 = vmul.f32 %v747, 0.70710677
    %v780 = vmul.f32 %v748, 0.70710677
    %v781 = vmul.f32 %v749, 0.70710677
    %v782 = vmul.f32 %v750, 0.70710677
    %v783 = vmul.f32 %v751, 0.70710677
    %v784 = vand.u32 2147483647, %v768
    %v785 = vand.u32 2147483647, %v769
    %v786 = vand.u32 2147483647, %v770
    %v787 = vand.u32 2147483647, %v771
    %v788 = vand.u32 2147483647, %v772
    %v789 = vand.u32 2147483647, %v773
    %v790 = vand.u32 2147483647, %v774
    %v791 = vand.u32 2147483647, %v775
    %v792 = vand.u32 2147483647, %v776
    %v793 = vand.u32 2147483647, %v777
    %v794 = vand.u32 2147483647, %v778
    %v795 = vand.u32 2147483647, %v779
    %v796 = vand.u32 2147483647, %v780
    %v797 = vand.u32 2147483647, %v781
    %v798 = vand.u32 2147483647, %v782
    %v799 = vand.u32 2147483647, %v783
    %v800 = vmul.f32 %v784, 0.3275911
    %v801 = vmul.f32 %v785, 0.3275911
    %v802 = vmul.f32 %v786, 0.3275911
    %v803 = vmul.f32 %v787, 0.3275911
    %v804 = vmul.f32 %v788, 0.3275911
    %v805 = vmul.f32 %v789, 0.3275911
    %v806 = vmul.f32 %v790, 0.3275911
    %v807 = vmul.f32 %v791, 0.3275911
    %v808 = vmul.f32 %v792, 0.3275911
    %v809 = vmul.f32 %v793, 0.3275911
    %v810 = vmul.f32 %v794, 0.3275911
    %v811 = vmul.f32 %v795, 0.3275911
    %v812 = vmul.f32 %v796, 0.3275911
    %v813 = vmul.f32 %v797, 0.3275911
    %v814 = vmul.f32 %v798, 0.3275911
    %v815 = vmul.f32 %v799, 0.3275911
    %v816 = vadd.f32 %v800, 1.0
    %v817 = vadd.f32 %v801, 1.0
    %v818 = vadd.f32 %v802, 1.0
    %v819 = vadd.f32 %v803, 1.0
    %v820 = vadd.f32 %v804, 1.0
    %v821 = vadd.f32 %v805, 1.0
    %v822 = vadd.f32 %v806, 1.0
    %v823 = vadd.f32 %v807, 1.0
    %v824 = vadd.f32 %v808, 1.0
    %v825 = vadd.f32 %v809, 1.0
    %v826 = vadd.f32 %v810, 1.0
    %v827 = vadd.f32 %v811, 1.0
    %v828 = vadd.f32 %v812, 1.0
    %v829 = vadd.f32 %v813, 1.0
    %v830 = vadd.f32 %v814, 1.0
    %v831 = vadd.f32 %v815, 1.0
    %v832 = vrcp.pop %v816
    %v833 = vmul.f32 %v816, %v832
    %v834 = vsub.f32 1.0, %v833
    %v835 = vmul.f32 %v832, %v834
    %v836 = vadd.f32 %v832, %v835
    %vm837 = vweird.f32 %v816
    %vm838 = vweird.f32 %v832
    %vm839 = vmor %vm837, %vm838
    %v840 = vsel %vm839, %v832, %v836
    %v841 = vand.u32 2147483647, %v816
    %vm842 = vcmp.eq.f32.partialorder %v841, 8.507059e+37
    %v843 = vand.u32 %v816, 2147483648
    %v844 = vor.u32 1.1754944e-38, %v843
    %v845 = vsel %vm842, %v844, %v840
    %v846 = vmul.f32 1.0, %v845
    %v847 = vrcp.pop %v817
    %v848 = vmul.f32 %v817, %v847
    %v849 = vsub.f32 1.0, %v848
    %v850 = vmul.f32 %v847, %v849
    %v851 = vadd.f32 %v847, %v850
    %vm852 = vweird.f32 %v817
    %vm853 = vweird.f32 %v847
    %vm854 = vmor %vm852, %vm853
    %v855 = vsel %vm854, %v847, %v851
    %v856 = vand.u32 2147483647, %v817
    %vm857 = vcmp.eq.f32.partialorder %v856, 8.507059e+37
    %v858 = vand.u32 %v817, 2147483648
    %v859 = vor.u32 1.1754944e-38, %v858
    %v860 = vsel %vm857, %v859, %v855
    %v861 = vmul.f32 1.0, %v860
    %v862 = vrcp.pop %v818
    %v863 = vmul.f32 %v818, %v862
    %v864 = vsub.f32 1.0, %v863
    %v865 = vmul.f32 %v862, %v864
    %v866 = vadd.f32 %v862, %v865
    %vm867 = vweird.f32 %v818
    %vm868 = vweird.f32 %v862
    %vm869 = vmor %vm867, %vm868
    %v870 = vsel %vm869, %v862, %v866
    %v871 = vand.u32 2147483647, %v818
    %vm872 = vcmp.eq.f32.partialorder %v871, 8.507059e+37
    %v873 = vand.u32 %v818, 2147483648
    %v874 = vor.u32 1.1754944e-38, %v873
    %v875 = vsel %vm872, %v874, %v870
    %v876 = vmul.f32 1.0, %v875
    %v877 = vrcp.pop %v819
    %v878 = vmul.f32 %v819, %v877
    %v879 = vsub.f32 1.0, %v878
    %v880 = vmul.f32 %v877, %v879
    %v881 = vadd.f32 %v877, %v880
    %vm882 = vweird.f32 %v819
    %vm883 = vweird.f32 %v877
    %vm884 = vmor %vm882, %vm883
    %v885 = vsel %vm884, %v877, %v881
    %v886 = vand.u32 2147483647, %v819
    %vm887 = vcmp.eq.f32.partialorder %v886, 8.507059e+37
    %v888 = vand.u32 %v819, 2147483648
    %v889 = vor.u32 1.1754944e-38, %v888
    %v890 = vsel %vm887, %v889, %v885
    %v891 = vmul.f32 1.0, %v890
    %v892 = vrcp.pop %v820
    %v893 = vmul.f32 %v820, %v892
    %v894 = vsub.f32 1.0, %v893
    %v895 = vmul.f32 %v892, %v894
    %v896 = vadd.f32 %v892, %v895
    %vm897 = vweird.f32 %v820
    %vm898 = vweird.f32 %v892
    %vm899 = vmor %vm897, %vm898
    %v900 = vsel %vm899, %v892, %v896
    %v901 = vand.u32 2147483647, %v820
    %vm902 = vcmp.eq.f32.partialorder %v901, 8.507059e+37
    %v903 = vand.u32 %v820, 2147483648
    %v904 = vor.u32 1.1754944e-38, %v903
    %v905 = vsel %vm902, %v904, %v900
    %v906 = vmul.f32 1.0, %v905
    %v907 = vrcp.pop %v821
    %v908 = vmul.f32 %v821, %v907
    %v909 = vsub.f32 1.0, %v908
    %v910 = vmul.f32 %v907, %v909
    %v911 = vadd.f32 %v907, %v910
    %vm912 = vweird.f32 %v821
    %vm913 = vweird.f32 %v907
    %vm914 = vmor %vm912, %vm913
    %v915 = vsel %vm914, %v907, %v911
    %v916 = vand.u32 2147483647, %v821
    %vm917 = vcmp.eq.f32.partialorder %v916, 8.507059e+37
    %v918 = vand.u32 %v821, 2147483648
    %v919 = vor.u32 1.1754944e-38, %v918
    %v920 = vsel %vm917, %v919, %v915
    %v921 = vmul.f32 1.0, %v920
    %v922 = vrcp.pop %v822
    %v923 = vmul.f32 %v822, %v922
    %v924 = vsub.f32 1.0, %v923
    %v925 = vmul.f32 %v922, %v924
    %v926 = vadd.f32 %v922, %v925
    %vm927 = vweird.f32 %v822
    %vm928 = vweird.f32 %v922
    %vm929 = vmor %vm927, %vm928
    %v930 = vsel %vm929, %v922, %v926
    %v931 = vand.u32 2147483647, %v822
    %vm932 = vcmp.eq.f32.partialorder %v931, 8.507059e+37
    %v933 = vand.u32 %v822, 2147483648
    %v934 = vor.u32 1.1754944e-38, %v933
    %v935 = vsel %vm932, %v934, %v930
    %v936 = vmul.f32 1.0, %v935
    %v937 = vrcp.pop %v823
    %v938 = vmul.f32 %v823, %v937
    %v939 = vsub.f32 1.0, %v938
    %v940 = vmul.f32 %v937, %v939
    %v941 = vadd.f32 %v937, %v940
    %vm942 = vweird.f32 %v823
    %vm943 = vweird.f32 %v937
    %vm944 = vmor %vm942, %vm943
    %v945 = vsel %vm944, %v937, %v941
    %v946 = vand.u32 2147483647, %v823
    %vm947 = vcmp.eq.f32.partialorder %v946, 8.507059e+37
    %v948 = vand.u32 %v823, 2147483648
    %v949 = vor.u32 1.1754944e-38, %v948
    %v950 = vsel %vm947, %v949, %v945
    %v951 = vmul.f32 1.0, %v950
    %v952 = vrcp.pop %v824
    %v953 = vmul.f32 %v824, %v952
    %v954 = vsub.f32 1.0, %v953
    %v955 = vmul.f32 %v952, %v954
    %v956 = vadd.f32 %v952, %v955
    %vm957 = vweird.f32 %v824
    %vm958 = vweird.f32 %v952
    %vm959 = vmor %vm957, %vm958
    %v960 = vsel %vm959, %v952, %v956
    %v961 = vand.u32 2147483647, %v824
    %vm962 = vcmp.eq.f32.partialorder %v961, 8.507059e+37
    %v963 = vand.u32 %v824, 2147483648
    %v964 = vor.u32 1.1754944e-38, %v963
    %v965 = vsel %vm962, %v964, %v960
    %v966 = vmul.f32 1.0, %v965
    %v967 = vrcp.pop %v825
    %v968 = vmul.f32 %v825, %v967
    %v969 = vsub.f32 1.0, %v968
    %v970 = vmul.f32 %v967, %v969
    %v971 = vadd.f32 %v967, %v970
    %vm972 = vweird.f32 %v825
    %vm973 = vweird.f32 %v967
    %vm974 = vmor %vm972, %vm973
    %v975 = vsel %vm974, %v967, %v971
    %v976 = vand.u32 2147483647, %v825
    %vm977 = vcmp.eq.f32.partialorder %v976, 8.507059e+37
    %v978 = vand.u32 %v825, 2147483648
    %v979 = vor.u32 1.1754944e-38, %v978
    %v980 = vsel %vm977, %v979, %v975
    %v981 = vmul.f32 1.0, %v980
    %v982 = vrcp.pop %v826
    %v983 = vmul.f32 %v826, %v982
    %v984 = vsub.f32 1.0, %v983
    %v985 = vmul.f32 %v982, %v984
    %v986 = vadd.f32 %v982, %v985
    %vm987 = vweird.f32 %v826
    %vm988 = vweird.f32 %v982
    %vm989 = vmor %vm987, %vm988
    %v990 = vsel %vm989, %v982, %v986
    %v991 = vand.u32 2147483647, %v826
    %vm992 = vcmp.eq.f32.partialorder %v991, 8.507059e+37
    %v993 = vand.u32 %v826, 2147483648
    %v994 = vor.u32 1.1754944e-38, %v993
    %v995 = vsel %vm992, %v994, %v990
    %v996 = vmul.f32 1.0, %v995
    %v997 = vrcp.pop %v827
    %v998 = vmul.f32 %v827, %v997
    %v999 = vsub.f32 1.0, %v998
    %v1000 = vmul.f32 %v997, %v999
    %v1001 = vadd.f32 %v997, %v1000
    %vm1002 = vweird.f32 %v827
    %vm1003 = vweird.f32 %v997
    %vm1004 = vmor %vm1002, %vm1003
    %v1005 = vsel %vm1004, %v997, %v1001
    %v1006 = vand.u32 2147483647, %v827
    %vm1007 = vcmp.eq.f32.partialorder %v1006, 8.507059e+37
    %v1008 = vand.u32 %v827, 2147483648
    %v1009 = vor.u32 1.1754944e-38, %v1008
    %v1010 = vsel %vm1007, %v1009, %v1005
    %v1011 = vmul.f32 1.0, %v1010
    %v1012 = vrcp.pop %v828
    %v1013 = vmul.f32 %v828, %v1012
    %v1014 = vsub.f32 1.0, %v1013
    %v1015 = vmul.f32 %v1012, %v1014
    %v1016 = vadd.f32 %v1012, %v1015
    %vm1017 = vweird.f32 %v828
    %vm1018 = vweird.f32 %v1012
    %vm1019 = vmor %vm1017, %vm1018
    %v1020 = vsel %vm1019, %v1012, %v1016
    %v1021 = vand.u32 2147483647, %v828
    %vm1022 = vcmp.eq.f32.partialorder %v1021, 8.507059e+37
    %v1023 = vand.u32 %v828, 2147483648
    %v1024 = vor.u32 1.1754944e-38, %v1023
    %v1025 = vsel %vm1022, %v1024, %v1020
    %v1026 = vmul.f32 1.0, %v1025
    %v1027 = vrcp.pop %v829
    %v1028 = vmul.f32 %v829, %v1027
    %v1029 = vsub.f32 1.0, %v1028
    %v1030 = vmul.f32 %v1027, %v1029
    %v1031 = vadd.f32 %v1027, %v1030
    %vm1032 = vweird.f32 %v829
    %vm1033 = vweird.f32 %v1027
    %vm1034 = vmor %vm1032, %vm1033
    %v1035 = vsel %vm1034, %v1027, %v1031
    %v1036 = vand.u32 2147483647, %v829
    %vm1037 = vcmp.eq.f32.partialorder %v1036, 8.507059e+37
    %v1038 = vand.u32 %v829, 2147483648
    %v1039 = vor.u32 1.1754944e-38, %v1038
    %v1040 = vsel %vm1037, %v1039, %v1035
    %v1041 = vmul.f32 1.0, %v1040
    %v1042 = vrcp.pop %v830
    %v1043 = vmul.f32 %v830, %v1042
    %v1044 = vsub.f32 1.0, %v1043
    %v1045 = vmul.f32 %v1042, %v1044
    %v1046 = vadd.f32 %v1042, %v1045
    %vm1047 = vweird.f32 %v830
    %vm1048 = vweird.f32 %v1042
    %vm1049 = vmor %vm1047, %vm1048
    %v1050 = vsel %vm1049, %v1042, %v1046
    %v1051 = vand.u32 2147483647, %v830
    %vm1052 = vcmp.eq.f32.partialorder %v1051, 8.507059e+37
    %v1053 = vand.u32 %v830, 2147483648
    %v1054 = vor.u32 1.1754944e-38, %v1053
    %v1055 = vsel %vm1052, %v1054, %v1050
    %v1056 = vmul.f32 1.0, %v1055
    %v1057 = vrcp.pop %v831
    %v1058 = vmul.f32 %v831, %v1057
    %v1059 = vsub.f32 1.0, %v1058
    %v1060 = vmul.f32 %v1057, %v1059
    %v1061 = vadd.f32 %v1057, %v1060
    %vm1062 = vweird.f32 %v831
    %vm1063 = vweird.f32 %v1057
    %vm1064 = vmor %vm1062, %vm1063
    %v1065 = vsel %vm1064, %v1057, %v1061
    %v1066 = vand.u32 2147483647, %v831
    %vm1067 = vcmp.eq.f32.partialorder %v1066, 8.507059e+37
    %v1068 = vand.u32 %v831, 2147483648
    %v1069 = vor.u32 1.1754944e-38, %v1068
    %v1070 = vsel %vm1067, %v1069, %v1065
    %v1071 = vmul.f32 1.0, %v1070
    %v1072 = vmul.f32 %v846, 1.0614054
    %v1073 = vmul.f32 %v861, 1.0614054
    %v1074 = vmul.f32 %v876, 1.0614054
    %v1075 = vmul.f32 %v891, 1.0614054
    %v1076 = vmul.f32 %v906, 1.0614054
    %v1077 = vmul.f32 %v921, 1.0614054
    %v1078 = vmul.f32 %v936, 1.0614054
    %v1079 = vmul.f32 %v951, 1.0614054
    %v1080 = vmul.f32 %v966, 1.0614054
    %v1081 = vmul.f32 %v981, 1.0614054
    %v1082 = vmul.f32 %v996, 1.0614054
    %v1083 = vmul.f32 %v1011, 1.0614054
    %v1084 = vmul.f32 %v1026, 1.0614054
    %v1085 = vmul.f32 %v1041, 1.0614054
    %v1086 = vmul.f32 %v1056, 1.0614054
    %v1087 = vmul.f32 %v1071, 1.0614054
    %v1088 = vadd.f32 %v1072, -1.4531521
    %v1089 = vadd.f32 %v1073, -1.4531521
    %v1090 = vadd.f32 %v1074, -1.4531521
    %v1091 = vadd.f32 %v1075, -1.4531521
    %v1092 = vadd.f32 %v1076, -1.4531521
    %v1093 = vadd.f32 %v1077, -1.4531521
    %v1094 = vadd.f32 %v1078, -1.4531521
    %v1095 = vadd.f32 %v1079, -1.4531521
    %v1096 = vadd.f32 %v1080, -1.4531521
    %v1097 = vadd.f32 %v1081, -1.4531521
    %v1098 = vadd.f32 %v1082, -1.4531521
    %v1099 = vadd.f32 %v1083, -1.4531521
    %v1100 = vadd.f32 %v1084, -1.4531521
    %v1101 = vadd.f32 %v1085, -1.4531521
    %v1102 = vadd.f32 %v1086, -1.4531521
    %v1103 = vadd.f32 %v1087, -1.4531521
    %v1104 = vmul.f32 %v1088, %v846
    %v1105 = vmul.f32 %v1089, %v861
    %v1106 = vmul.f32 %v1090, %v876
    %v1107 = vmul.f32 %v1091, %v891
    %v1108 = vmul.f32 %v1092, %v906
    %v1109 = vmul.f32 %v1093, %v921
    %v1110 = vmul.f32 %v1094, %v936
    %v1111 = vmul.f32 %v1095, %v951
    %v1112 = vmul.f32 %v1096, %v966
    %v1113 = vmul.f32 %v1097, %v981
    %v1114 = vmul.f32 %v1098, %v996
    %v1115 = vmul.f32 %v1099, %v1011
    %v1116 = vmul.f32 %v1100, %v1026
    %v1117 = vmul.f32 %v1101, %v1041
    %v1118 = vmul.f32 %v1102, %v1056
    %v1119 = vmul.f32 %v1103, %v1071
    %v1120 = vadd.f32 %v1104, 1.4214138
    %v1121 = vadd.f32 %v1105, 1.4214138
    %v1122 = vadd.f32 %v1106, 1.4214138
    %v1123 = vadd.f32 %v1107, 1.4214138
    %v1124 = vadd.f32 %v1108, 1.4214138
    %v1125 = vadd.f32 %v1109, 1.4214138
    %v1126 = vadd.f32 %v1110, 1.4214138
    %v1127 = vadd.f32 %v1111, 1.4214138
    %v1128 = vadd.f32 %v1112, 1.4214138
    %v1129 = vadd.f32 %v1113, 1.4214138
    %v1130 = vadd.f32 %v1114, 1.4214138
    %v1131 = vadd.f32 %v1115, 1.4214138
    %v1132 = vadd.f32 %v1116, 1.4214138
    %v1133 = vadd.f32 %v1117, 1.4214138
    %v1134 = vadd.f32 %v1118, 1.4214138
    %v1135 = vadd.f32 %v1119, 1.4214138
    %v1136 = vmul.f32 %v1120, %v846
    %v1137 = vmul.f32 %v1121, %v861
    %v1138 = vmul.f32 %v1122, %v876
    %v1139 = vmul.f32 %v1123, %v891
    %v1140 = vmul.f32 %v1124, %v906
    %v1141 = vmul.f32 %v1125, %v921
    %v1142 = vmul.f32 %v1126, %v936
    %v1143 = vmul.f32 %v1127, %v951
    %v1144 = vmul.f32 %v1128, %v966
    %v1145 = vmul.f32 %v1129, %v981
    %v1146 = vmul.f32 %v1130, %v996
    %v1147 = vmul.f32 %v1131, %v1011
    %v1148 = vmul.f32 %v1132, %v1026
    %v1149 = vmul.f32 %v1133, %v1041
    %v1150 = vmul.f32 %v1134, %v1056
    %v1151 = vmul.f32 %v1135, %v1071
    %v1152 = vadd.f32 %v1136, -0.28449672
    %v1153 = vadd.f32 %v1137, -0.28449672
    %v1154 = vadd.f32 %v1138, -0.28449672
    %v1155 = vadd.f32 %v1139, -0.28449672
    %v1156 = vadd.f32 %v1140, -0.28449672
    %v1157 = vadd.f32 %v1141, -0.28449672
    %v1158 = vadd.f32 %v1142, -0.28449672
    %v1159 = vadd.f32 %v1143, -0.28449672
    %v1160 = vadd.f32 %v1144, -0.28449672
    %v1161 = vadd.f32 %v1145, -0.28449672
    %v1162 = vadd.f32 %v1146, -0.28449672
    %v1163 = vadd.f32 %v1147, -0.28449672
    %v1164 = vadd.f32 %v1148, -0.28449672
    %v1165 = vadd.f32 %v1149, -0.28449672
    %v1166 = vadd.f32 %v1150, -0.28449672
    %v1167 = vadd.f32 %v1151, -0.28449672
    %v1168 = vmul.f32 %v1152, %v846
    %v1169 = vmul.f32 %v1153, %v861
    %v1170 = vmul.f32 %v1154, %v876
    %v1171 = vmul.f32 %v1155, %v891
    %v1172 = vmul.f32 %v1156, %v906
    %v1173 = vmul.f32 %v1157, %v921
    %v1174 = vmul.f32 %v1158, %v936
    %v1175 = vmul.f32 %v1159, %v951
    %v1176 = vmul.f32 %v1160, %v966
    %v1177 = vmul.f32 %v1161, %v981
    %v1178 = vmul.f32 %v1162, %v996
    %v1179 = vmul.f32 %v1163, %v1011
    %v1180 = vmul.f32 %v1164, %v1026
    %v1181 = vmul.f32 %v1165, %v1041
    %v1182 = vmul.f32 %v1166, %v1056
    %v1183 = vmul.f32 %v1167, %v1071
    %v1184 = vadd.f32 %v1168, 0.2548296
    %v1185 = vadd.f32 %v1169, 0.2548296
    %v1186 = vadd.f32 %v1170, 0.2548296
    %v1187 = vadd.f32 %v1171, 0.2548296
    %v1188 = vadd.f32 %v1172, 0.2548296
    %v1189 = vadd.f32 %v1173, 0.2548296
    %v1190 = vadd.f32 %v1174, 0.2548296
    %v1191 = vadd.f32 %v1175, 0.2548296
    %v1192 = vadd.f32 %v1176, 0.2548296
    %v1193 = vadd.f32 %v1177, 0.2548296
    %v1194 = vadd.f32 %v1178, 0.2548296
    %v1195 = vadd.f32 %v1179, 0.2548296
    %v1196 = vadd.f32 %v1180, 0.2548296
    %v1197 = vadd.f32 %v1181, 0.2548296
    %v1198 = vadd.f32 %v1182, 0.2548296
    %v1199 = vadd.f32 %v1183, 0.2548296
    %v1200 = vmul.f32 %v1184, %v846
    %v1201 = vmul.f32 %v1185, %v861
    %v1202 = vmul.f32 %v1186, %v876
    %v1203 = vmul.f32 %v1187, %v891
    %v1204 = vmul.f32 %v1188, %v906
    %v1205 = vmul.f32 %v1189, %v921
    %v1206 = vmul.f32 %v1190, %v936
    %v1207 = vmul.f32 %v1191, %v951
    %v1208 = vmul.f32 %v1192, %v966
    %v1209 = vmul.f32 %v1193, %v981
    %v1210 = vmul.f32 %v1194, %v996
    %v1211 = vmul.f32 %v1195, %v1011
    %v1212 = vmul.f32 %v1196, %v1026
    %v1213 = vmul.f32 %v1197, %v1041
    %v1214 = vmul.f32 %v1198, %v1056
    %v1215 = vmul.f32 %v1199, %v1071
    %v1216 = vsub.f32 0.0, %v784
    %v1217 = vsub.f32 0.0, %v785
    %v1218 = vsub.f32 0.0, %v786
    %v1219 = vsub.f32 0.0, %v787
    %v1220 = vsub.f32 0.0, %v788
    %v1221 = vsub.f32 0.0, %v789
    %v1222 = vsub.f32 0.0, %v790
    %v1223 = vsub.f32 0.0, %v791
    %v1224 = vsub.f32 0.0, %v792
    %v1225 = vsub.f32 0.0, %v793
    %v1226 = vsub.f32 0.0, %v794
    %v1227 = vsub.f32 0.0, %v795
    %v1228 = vsub.f32 0.0, %v796
    %v1229 = vsub.f32 0.0, %v797
    %v1230 = vsub.f32 0.0, %v798
    %v1231 = vsub.f32 0.0, %v799
    %v1232 = vmul.f32 %v1216, %v784
    %v1233 = vmul.f32 %v1217, %v785
    %v1234 = vmul.f32 %v1218, %v786
    %v1235 = vmul.f32 %v1219, %v787
    %v1236 = vmul.f32 %v1220, %v788
    %v1237 = vmul.f32 %v1221, %v789
    %v1238 = vmul.f32 %v1222, %v790
    %v1239 = vmul.f32 %v1223, %v791
    %v1240 = vmul.f32 %v1224, %v792
    %v1241 = vmul.f32 %v1225, %v793
    %v1242 = vmul.f32 %v1226, %v794
    %v1243 = vmul.f32 %v1227, %v795
    %v1244 = vmul.f32 %v1228, %v796
    %v1245 = vmul.f32 %v1229, %v797
    %v1246 = vmul.f32 %v1230, %v798
    %v1247 = vmul.f32 %v1231, %v799
    %v1248 = vmul.f32 %v1232, 1.442695
    %v1249 = vpow.pop %v1248
    %v1250 = vmul.f32 %v1233, 1.442695
    %v1251 = vpow.pop %v1250
    %v1252 = vmul.f32 %v1234, 1.442695
    %v1253 = vpow.pop %v1252
    %v1254 = vmul.f32 %v1235, 1.442695
    %v1255 = vpow.pop %v1254
    %v1256 = vmul.f32 %v1236, 1.442695
    %v1257 = vpow.pop %v1256
    %v1258 = vmul.f32 %v1237, 1.442695
    %v1259 = vpow.pop %v1258
    %v1260 = vmul.f32 %v1238, 1.442695
    %v1261 = vpow.pop %v1260
    %v1262 = vmul.f32 %v1239, 1.442695
    %v1263 = vpow.pop %v1262
    %v1264 = vmul.f32 %v1240, 1.442695
    %v1265 = vpow.pop %v1264
    %v1266 = vmul.f32 %v1241, 1.442695
    %v1267 = vpow.pop %v1266
    %v1268 = vmul.f32 %v1242, 1.442695
    %v1269 = vpow.pop %v1268
    %v1270 = vmul.f32 %v1243, 1.442695
    %v1271 = vpow.pop %v1270
    %v1272 = vmul.f32 %v1244, 1.442695
    %v1273 = vpow.pop %v1272
    %v1274 = vmul.f32 %v1245, 1.442695
    %v1275 = vpow.pop %v1274
    %v1276 = vmul.f32 %v1246, 1.442695
    %v1277 = vpow.pop %v1276
    %v1278 = vmul.f32 %v1247, 1.442695
    %v1279 = vpow.pop %v1278
    %v1280 = vmul.f32 %v1200, %v1249
    %v1281 = vmul.f32 %v1201, %v1251
    %v1282 = vmul.f32 %v1202, %v1253
    %v1283 = vmul.f32 %v1203, %v1255
    %v1284 = vmul.f32 %v1204, %v1257
    %v1285 = vmul.f32 %v1205, %v1259
    %v1286 = vmul.f32 %v1206, %v1261
    %v1287 = vmul.f32 %v1207, %v1263
    %v1288 = vmul.f32 %v1208, %v1265
    %v1289 = vmul.f32 %v1209, %v1267
    %v1290 = vmul.f32 %v1210, %v1269
    %v1291 = vmul.f32 %v1211, %v1271
    %v1292 = vmul.f32 %v1212, %v1273
    %v1293 = vmul.f32 %v1213, %v1275
    %v1294 = vmul.f32 %v1214, %v1277
    %v1295 = vmul.f32 %v1215, %v1279
    %v1296 = vsub.f32 1.0, %v1280
    %v1297 = vsub.f32 1.0, %v1281
    %v1298 = vsub.f32 1.0, %v1282
    %v1299 = vsub.f32 1.0, %v1283
    %v1300 = vsub.f32 1.0, %v1284
    %v1301 = vsub.f32 1.0, %v1285
    %v1302 = vsub.f32 1.0, %v1286
    %v1303 = vsub.f32 1.0, %v1287
    %v1304 = vsub.f32 1.0, %v1288
    %v1305 = vsub.f32 1.0, %v1289
    %v1306 = vsub.f32 1.0, %v1290
    %v1307 = vsub.f32 1.0, %v1291
    %v1308 = vsub.f32 1.0, %v1292
    %v1309 = vsub.f32 1.0, %v1293
    %v1310 = vsub.f32 1.0, %v1294
    %v1311 = vsub.f32 1.0, %v1295
    %vm1312 = vcmp.lt.f32.partialorder %v768, 0.0
    %vm1313 = vcmp.lt.f32.partialorder %v769, 0.0
    %vm1314 = vcmp.lt.f32.partialorder %v770, 0.0
    %vm1315 = vcmp.lt.f32.partialorder %v771, 0.0
    %vm1316 = vcmp.lt.f32.partialorder %v772, 0.0
    %vm1317 = vcmp.lt.f32.partialorder %v773, 0.0
    %vm1318 = vcmp.lt.f32.partialorder %v774, 0.0
    %vm1319 = vcmp.lt.f32.partialorder %v775, 0.0
    %vm1320 = vcmp.lt.f32.partialorder %v776, 0.0
    %vm1321 = vcmp.lt.f32.partialorder %v777, 0.0
    %vm1322 = vcmp.lt.f32.partialorder %v778, 0.0
    %vm1323 = vcmp.lt.f32.partialorder %v779, 0.0
    %vm1324 = vcmp.lt.f32.partialorder %v780, 0.0
    %vm1325 = vcmp.lt.f32.partialorder %v781, 0.0
    %vm1326 = vcmp.lt.f32.partialorder %v782, 0.0
    %vm1327 = vcmp.lt.f32.partialorder %v783, 0.0
    %v1328 = vsub.f32 0.0, %v1296
    %v1329 = vsub.f32 0.0, %v1297
    %v1330 = vsub.f32 0.0, %v1298
    %v1331 = vsub.f32 0.0, %v1299
    %v1332 = vsub.f32 0.0, %v1300
    %v1333 = vsub.f32 0.0, %v1301
    %v1334 = vsub.f32 0.0, %v1302
    %v1335 = vsub.f32 0.0, %v1303
    %v1336 = vsub.f32 0.0, %v1304
    %v1337 = vsub.f32 0.0, %v1305
    %v1338 = vsub.f32 0.0, %v1306
    %v1339 = vsub.f32 0.0, %v1307
    %v1340 = vsub.f32 0.0, %v1308
    %v1341 = vsub.f32 0.0, %v1309
    %v1342 = vsub.f32 0.0, %v1310
    %v1343 = vsub.f32 0.0, %v1311
    %v1344 = vsel %vm1312, %v1328, %v1296
    %v1345 = vsel %vm1313, %v1329, %v1297
    %v1346 = vsel %vm1314, %v1330, %v1298
    %v1347 = vsel %vm1315, %v1331, %v1299
    %v1348 = vsel %vm1316, %v1332, %v1300
    %v1349 = vsel %vm1317, %v1333, %v1301
    %v1350 = vsel %vm1318, %v1334, %v1302
    %v1351 = vsel %vm1319, %v1335, %v1303
    %v1352 = vsel %vm1320, %v1336, %v1304
    %v1353 = vsel %vm1321, %v1337, %v1305
    %v1354 = vsel %vm1322, %v1338, %v1306
    %v1355 = vsel %vm1323, %v1339, %v1307
    %v1356 = vsel %vm1324, %v1340, %v1308
    %v1357 = vsel %vm1325, %v1341, %v1309
    %v1358 = vsel %vm1326, %v1342, %v1310
    %v1359 = vsel %vm1327, %v1343, %v1311
    %v1360 = vadd.f32 %v1344, 1.0
    %v1361 = vadd.f32 %v1345, 1.0
    %v1362 = vadd.f32 %v1346, 1.0
    %v1363 = vadd.f32 %v1347, 1.0
    %v1364 = vadd.f32 %v1348, 1.0
    %v1365 = vadd.f32 %v1349, 1.0
    %v1366 = vadd.f32 %v1350, 1.0
    %v1367 = vadd.f32 %v1351, 1.0
    %v1368 = vadd.f32 %v1352, 1.0
    %v1369 = vadd.f32 %v1353, 1.0
    %v1370 = vadd.f32 %v1354, 1.0
    %v1371 = vadd.f32 %v1355, 1.0
    %v1372 = vadd.f32 %v1356, 1.0
    %v1373 = vadd.f32 %v1357, 1.0
    %v1374 = vadd.f32 %v1358, 1.0
    %v1375 = vadd.f32 %v1359, 1.0
    %v1376 = vmul.f32 %v752, %v1360
    %v1377 = vmul.f32 %v753, %v1361
    %v1378 = vmul.f32 %v754, %v1362
    %v1379 = vmul.f32 %v755, %v1363
    %v1380 = vmul.f32 %v756, %v1364
    %v1381 = vmul.f32 %v757, %v1365
    %v1382 = vmul.f32 %v758, %v1366
    %v1383 = vmul.f32 %v759, %v1367
    %v1384 = vmul.f32 %v760, %v1368
    %v1385 = vmul.f32 %v761, %v1369
    %v1386 = vmul.f32 %v762, %v1370
    %v1387 = vmul.f32 %v763, %v1371
    %v1388 = vmul.f32 %v764, %v1372
    %v1389 = vmul.f32 %v765, %v1373
    %v1390 = vmul.f32 %v766, %v1374
    %v1391 = vmul.f32 %v767, %v1375
    %v1392 = vpack.c.bf16 %v1377, %v1376
    %v1393 = vpack.c.bf16 %v1379, %v1378
    %v1394 = vpack.c.bf16 %v1381, %v1380
    %v1395 = vpack.c.bf16 %v1383, %v1382
    %v1396 = vpack.c.bf16 %v1385, %v1384
    %v1397 = vpack.c.bf16 %v1387, %v1386
    %v1398 = vpack.c.bf16 %v1389, %v1388
    %v1399 = vpack.c.bf16 %v1391, %v1390
    %v1400 = vld [vmem:[#allocation9] sm:$0xf]
    %v1401 = vld [vmem:[#allocation9 + $0x4] sm:$0xf]
    %v1402 = vld [vmem:[#allocation9 + $0x8] sm:$0xf]
    %v1403 = vld [vmem:[#allocation9 + $0xc] sm:$0xf]
    %v1404 = vld [vmem:[#allocation9 + $0x10] sm:$0xf]
    %v1405 = vld [vmem:[#allocation9 + $0x14] sm:$0xf]
    %v1406 = vld [vmem:[#allocation9 + $0x18] sm:$0xf]
    %v1407 = vld [vmem:[#allocation9 + $0x1c] sm:$0xf]
    %v1408 = vld [vmem:[#allocation9 + $0x20] sm:$0xf]
    %v1409 = vld [vmem:[#allocation9 + $0x24] sm:$0xf]
    %v1410 = vld [vmem:[#allocation9 + $0x28] sm:$0xf]
    %v1411 = vld [vmem:[#allocation9 + $0x2c] sm:$0xf]
    %v1412 = vld [vmem:[#allocation9 + $0x30] sm:$0xf]
    %v1413 = vld [vmem:[#allocation9 + $0x34] sm:$0xf]
    %v1414 = vld [vmem:[#allocation9 + $0x38] sm:$0xf]
    %v1415 = vld [vmem:[#allocation9 + $0x3c] sm:$0xf]
    %v1416 = vld [vmem:[%s6] sm:$0x1]
    %v1418 = vperm.slane %v1416, 0
    %v1436 = vunpack.c.l.b16 %v1400
    %v1437 = vunpack.c.l.b16 %v1401
    %v1438 = vunpack.c.l.b16 %v1402
    %v1439 = vunpack.c.l.b16 %v1403
    %v1440 = vunpack.c.l.b16 %v1404
    %v1441 = vunpack.c.l.b16 %v1405
    %v1442 = vunpack.c.l.b16 %v1406
    %v1443 = vunpack.c.l.b16 %v1407
    %v1444 = vunpack.c.l.b16 %v1408
    %v1445 = vunpack.c.l.b16 %v1409
    %v1446 = vunpack.c.l.b16 %v1410
    %v1447 = vunpack.c.l.b16 %v1411
    %v1448 = vunpack.c.l.b16 %v1412
    %v1449 = vunpack.c.l.b16 %v1413
    %v1450 = vunpack.c.l.b16 %v1414
    %v1451 = vunpack.c.l.b16 %v1415
    %v1452 = vpack.c.b16 %v1437, %v1436
    %v1453 = vpack.c.b16 %v1439, %v1438
    %v1454 = vpack.c.b16 %v1441, %v1440
    %v1455 = vpack.c.b16 %v1443, %v1442
    %v1456 = vpack.c.b16 %v1445, %v1444
    %v1457 = vpack.c.b16 %v1447, %v1446
    %v1458 = vpack.c.b16 %v1449, %v1448
    %v1459 = vpack.c.b16 %v1451, %v1450
    %1468 = vmatpush.bf16.msra.mxu0 %v1459
    %1469 = vmatpush.bf16.msra.mxu0 %v1458
    %1470 = vmatpush.bf16.msra.mxu0 %v1457
    %1471 = vmatpush.bf16.msra.mxu0 %v1456
    %1472 = vmatpush.bf16.msra.mxu0 %v1455
    %1473 = vmatpush.bf16.msra.mxu0 %v1454
    %1474 = vmatpush.bf16.msra.mxu0 %v1453
    %1475 = vmatpush.bf16.msra.mxu0 %v1452
    %1476 = vmatmul.bf16.gmra.mxu0 %v1392
    %v1477 = vpop.f32.mrf.mxu0
    %v1478 = vadd.f32 %v1418, %v1477
    %v1479 = vpop.f32.mrf.mxu0
    %v1480 = vadd.f32 %v1418, %v1479
    %1481 = vmatmul.bf16.gmra.mxu0 %v1393
    %v1482 = vpop.f32.mrf.mxu0
    %v1483 = vadd.f32 %v1418, %v1482
    %v1484 = vpop.f32.mrf.mxu0
    %v1485 = vadd.f32 %v1418, %v1484
    %1486 = vmatmul.bf16.gmra.mxu0 %v1394
    %v1487 = vpop.f32.mrf.mxu0
    %v1488 = vadd.f32 %v1418, %v1487
    %v1489 = vpop.f32.mrf.mxu0
    %v1490 = vadd.f32 %v1418, %v1489
    %1491 = vmatmul.bf16.gmra.mxu0 %v1395
    %v1492 = vpop.f32.mrf.mxu0
    %v1493 = vadd.f32 %v1418, %v1492
    %v1494 = vpop.f32.mrf.mxu0
    %v1495 = vadd.f32 %v1418, %v1494
    %1496 = vmatmul.bf16.gmra.mxu0 %v1396
    %v1497 = vpop.f32.mrf.mxu0
    %v1498 = vadd.f32 %v1418, %v1497
    %v1499 = vpop.f32.mrf.mxu0
    %v1500 = vadd.f32 %v1418, %v1499
    %1501 = vmatmul.bf16.gmra.mxu0 %v1397
    %v1502 = vpop.f32.mrf.mxu0
    %v1503 = vadd.f32 %v1418, %v1502
    %v1504 = vpop.f32.mrf.mxu0
    %v1505 = vadd.f32 %v1418, %v1504
    %1506 = vmatmul.bf16.gmra.mxu0 %v1398
    %v1507 = vpop.f32.mrf.mxu0
    %v1508 = vadd.f32 %v1418, %v1507
    %v1509 = vpop.f32.mrf.mxu0
    %v1510 = vadd.f32 %v1418, %v1509
    %1511 = vmatmul.bf16.gmra.mxu0 %v1399
    %v1512 = vpop.f32.mrf.mxu0
    %v1513 = vadd.f32 %v1418, %v1512
    %v1514 = vpop.f32.mrf.mxu0
    %v1515 = vadd.f32 %v1418, %v1514
    %1516 = vdwg.mxu0
    %1517 = vst [vmem:[#allocation11] sm:$0xff] %v1478
    %1518 = vst [vmem:[#allocation11 + $0x8] sm:$0xff] %v1480
    %1519 = vst [vmem:[#allocation11 + $0x10] sm:$0xff] %v1483
    %1520 = vst [vmem:[#allocation11 + $0x18] sm:$0xff] %v1485
    %1521 = vst [vmem:[#allocation11 + $0x20] sm:$0xff] %v1488
    %1522 = vst [vmem:[#allocation11 + $0x28] sm:$0xff] %v1490
    %1523 = vst [vmem:[#allocation11 + $0x30] sm:$0xff] %v1493
    %1524 = vst [vmem:[#allocation11 + $0x38] sm:$0xff] %v1495
    %1525 = vst [vmem:[#allocation11 + $0x40] sm:$0xff] %v1498
    %1526 = vst [vmem:[#allocation11 + $0x48] sm:$0xff] %v1500
    %1527 = vst [vmem:[#allocation11 + $0x50] sm:$0xff] %v1503
    %1528 = vst [vmem:[#allocation11 + $0x58] sm:$0xff] %v1505
    %1529 = vst [vmem:[#allocation11 + $0x60] sm:$0xff] %v1508
    %1530 = vst [vmem:[#allocation11 + $0x68] sm:$0xff] %v1510
    %1531 = vst [vmem:[#allocation11 + $0x70] sm:$0xff] %v1513
    %1532 = vst [vmem:[#allocation11 + $0x78] sm:$0xff] %v1515
    // Predicated region
    $region46: #{tpu_custom_call.1} parent=1 // pred_check
      _
    $region47: #{tpu_custom_call.1} parent=1 // pred_check_branch
      %1534 = sbr.rel (0) target = $region49
    $region48: #{tpu_custom_call.1} parent=1 // pred_region
      %1536 = vsyncadd [#allocation5], 0
      %s1537 = sshll.u32 [#allocation11], 4
      %s1538 = int_to_ptr.vmem [resolvable:$true] %s1537
      %s1539 = sshll.u32 %s7, 4
      %s1540 = int_to_ptr.hbm [resolvable:$true] %s1539
      %1545 = dma.vmem_to_hbm [thread:$0]  %s1538, 2048, %s1540, [#allocation5], 128, 128, 8
    $region49: #{tpu_custom_call.1} parent=1 // pred_fallthru
      _
    // Predicated region
    $region50: #{tpu_custom_call.1} parent=1 // pred_check
      _
    $region51: #{tpu_custom_call.1} parent=1 // pred_check_branch
      %1547 = sbr.rel (0) target = $region53
    $region52: #{tpu_custom_call.1} parent=1 // pred_region
      %1549 = dma.done [#allocation5], 2048
    $region53: #{tpu_custom_call.1} parent=1 // pred_fallthru
      _
    %1550 = vsyncpa [#allocation4], 1
    %1551 = vsyncpa [#allocation7], 1
    %1552 = vsyncpa [#allocation10], 1
    %1553 = vsyncpa [#allocation5], 1

</llo_original>
